<compile_context>
chip_gen: v6e
topology: v6e:2x2x1
jax: 0.10.0
libtpu: 0.0.40
codegen_flags: <defaults>
</compile_context>

<pallas_src>
import functools

import jax
import jax.numpy as jnp
from jax import lax
from jax.experimental import pallas as pl
from jax.experimental.pallas import tpu as pltpu


# ----------------------------- Fused Pallas kernel ----------------------------

def _fused_lstm_kernel(g0_ref, whh_ref, wih_ref, brest_ref, fcw_ref, fcb_ref,
                       out_ref, *, num_layers: int, seq_len: int):
    """Entire (multi-layer LSTM + final Linear) forward in one kernel invocation.

    g0_ref   : (T, B, 4H)      precomputed layer-0 gate pre-activations (BN folded in)
    whh_ref  : (L, H, 4H)      hidden->gates weights, all layers
    wih_ref  : (max(L-1,1), H, 4H)  input->gates weights for layers 1..L-1 (dummy if L==1)
    brest_ref: (max(L-1,1), 1, 4H)  combined biases for layers 1..L-1 (dummy if L==1)
    fcw_ref  : (H, 1), fcb_ref: (1, 1)
    out_ref  : (B, 1)          final prediction for the padded batch
    """
    B = g0_ref.shape[1]
    H = whh_ref.shape[1]

    # Loop-invariant weights: load once, close over in the time loop.
    w_hh = [whh_ref[l] for l in range(num_layers)]
    w_ih = [wih_ref[l] for l in range(num_layers - 1)]
    b_up = [brest_ref[l] for l in range(num_layers - 1)]

    def cell(gates, c_prev):
        i_g = jax.nn.sigmoid(gates[:, 0 * H:1 * H])
        f_g = jax.nn.sigmoid(gates[:, 1 * H:2 * H])
        g_g = jnp.tanh(gates[:, 2 * H:3 * H])
        o_g = jax.nn.sigmoid(gates[:, 3 * H:4 * H])
        c_new = f_g * c_prev + i_g * g_g
        h_new = o_g * jnp.tanh(c_new)
        return h_new, c_new

    def step(t, carry):
        hs, cs = carry
        new_hs, new_cs = [], []

        # Layer 0: input projection precomputed -> only the recurrent matmul here.
        gates = g0_ref[t] + jnp.dot(hs[0], w_hh[0],
                                    preferred_element_type=jnp.float32)
        h_new, c_new = cell(gates, cs[0])
        new_hs.append(h_new)
        new_cs.append(c_new)

        # Layers 1..L-1 chained within the same timestep (inter-layer dropout = identity).
        for l in range(1, num_layers):
            gates = (jnp.dot(new_hs[l - 1], w_ih[l - 1],
                             preferred_element_type=jnp.float32)
                     + jnp.dot(hs[l], w_hh[l],
                               preferred_element_type=jnp.float32)
                     + b_up[l - 1])
            h_new, c_new = cell(gates, cs[l])
            new_hs.append(h_new)
            new_cs.append(c_new)

        return tuple(new_hs), tuple(new_cs)

    zeros = jnp.zeros((B, H), jnp.float32)
    init = (tuple(zeros for _ in range(num_layers)),
            tuple(zeros for _ in range(num_layers)))
    hs, _ = lax.fori_loop(0, seq_len, step, init, unroll=True)

    # Last-step Dropout(eval) = identity; final Linear(H -> 1) fused here.
    h_last = hs[num_layers - 1]
    out_ref[...] = (jnp.dot(h_last, fcw_ref[...],
                            preferred_element_type=jnp.float32)
                    + fcb_ref[...])


# ------------------------------- Full forward --------------------------------

def _round_up(x: int, m: int) -> int:
    return ((x + m - 1) // m) * m


def init_params(key, input_size: int, hidden_size: int, num_layers: int):
    """Deterministic parameter init matching the PyTorch module's shapes."""
    params = {}
    # BatchNorm1d(input_size): weight, bias, running_mean, running_var (non-trivial
    # values so the BN fold is actually exercised).
    key, kg, kb, km, kv = jax.random.split(key, 5)
    params["bn_gamma"] = jax.random.uniform(kg, (input_size,), jnp.float32, 0.5, 1.5)
    params["bn_beta"] = jax.random.uniform(kb, (input_size,), jnp.float32, -0.5, 0.5)
    params["bn_mean"] = 0.1 * jax.random.normal(km, (input_size,), jnp.float32)
    params["bn_var"] = jax.random.uniform(kv, (input_size,), jnp.float32, 0.5, 1.5)

    std = 1.0 / jnp.sqrt(hidden_size)
    layers = []
    for layer in range(num_layers):
        in_dim = input_size if layer == 0 else hidden_size
        key, k1, k2, k3, k4 = jax.random.split(key, 5)
        # PyTorch stores weight_ih as (4H, in_dim); we keep it transposed (in_dim, 4H),
        # gate order i, f, g, o.
        w_ih_t = jax.random.uniform(k1, (in_dim, 4 * hidden_size), jnp.float32, -std, std)
        w_hh_t = jax.random.uniform(k2, (hidden_size, 4 * hidden_size), jnp.float32, -std, std)
        b_ih = jax.random.uniform(k3, (4 * hidden_size,), jnp.float32, -std, std)
        b_hh = jax.random.uniform(k4, (4 * hidden_size,), jnp.float32, -std, std)
        layers.append({"w_ih_t": w_ih_t, "w_hh_t": w_hh_t,
                       "b": (b_ih + b_hh).reshape(1, 4 * hidden_size)})
    params["layers"] = layers

    key, k1, k2 = jax.random.split(key, 3)
    std_fc = 1.0 / jnp.sqrt(hidden_size)
    params["fc_w"] = jax.random.uniform(k1, (hidden_size, 1), jnp.float32, -std_fc, std_fc)
    params["fc_b"] = jax.random.uniform(k2, (1,), jnp.float32, -std_fc, std_fc)
    return params


@jax.jit
def lstm_forward(params, x_btf: jax.Array) -> jax.Array:
    """x_btf: (B, T, F) -> (B, 1)."""
    B, T, F = x_btf.shape
    eps = 1e-5
    num_layers = len(params["layers"])
    H = params["layers"][0]["w_hh_t"].shape[0]

    # ---- Fold eval-mode BatchNorm1d (running stats) into layer-0's input projection ----
    scale = params["bn_gamma"] * lax.rsqrt(params["bn_var"] + eps)    # (F,)
    shift = params["bn_beta"] - params["bn_mean"] * scale             # (F,)
    w0 = params["layers"][0]["w_ih_t"]                                # (F, 4H)
    b0 = params["layers"][0]["b"]                                     # (1, 4H)
    w0_eff = scale[:, None] * w0                                      # diag(scale) @ W_ih0
    b0_eff = b0 + shift[None, :] @ w0                                 # (1, 4H)

    # ---- Pad batch to f32 sublane multiple (8) ----
    B_pad = max(8, _round_up(B, 8))
    x_pad = jnp.pad(x_btf.astype(jnp.float32), ((0, B_pad - B), (0, 0), (0, 0)))

    # ---- Hoist layer-0 input projection out of the recurrence: one batched matmul ----
    # g0[t, b, :] = x[b, t, :] @ w0_eff + b0_eff   (time-major for clean in-kernel indexing)
    g0 = jnp.einsum("btf,fg->tbg", x_pad, w0_eff,
                    preferred_element_type=jnp.float32) + b0_eff      # (T, B_pad, 4H)

    # ---- Stack per-layer weights ----
    w_hh_all = jnp.stack([lp["w_hh_t"] for lp in params["layers"]])   # (L, H, 4H)
    if num_layers > 1:
        w_ih_rest = jnp.stack([params["layers"][l]["w_ih_t"]
                               for l in range(1, num_layers)])        # (L-1, H, 4H)
        b_rest = jnp.stack([params["layers"][l]["b"]
                            for l in range(1, num_layers)])           # (L-1, 1, 4H)
    else:  # dummies, never read inside the kernel
        w_ih_rest = jnp.zeros((1, H, 4 * H), jnp.float32)
        b_rest = jnp.zeros((1, 1, 4 * H), jnp.float32)

    fc_w = params["fc_w"]                                             # (H, 1)
    fc_b = params["fc_b"].reshape(1, 1)                               # (1, 1)

    kernel = functools.partial(_fused_lstm_kernel,
                               num_layers=num_layers, seq_len=T)
    vmem_spec = pl.BlockSpec(memory_space=pltpu.MemorySpace.VMEM)
    out_pad = pl.pallas_call(
        kernel,
        out_shape=jax.ShapeDtypeStruct((B_pad, 1), jnp.float32),
        in_specs=[vmem_spec] * 6,
        out_specs=vmem_spec,
    )(g0, w_hh_all, w_ih_rest, b_rest, fc_w, fc_b)

    return out_pad[:B]                                                # (B, 1)


# ------------------------------ Pure-JAX reference ----------------------------

def lstm_forward_ref(params, x_btf):
    B, T, F = x_btf.shape
    eps = 1e-5
    scale = params["bn_gamma"] / jnp.sqrt(params["bn_var"] + eps)
    shift = params["bn_beta"] - params["bn_mean"] * scale
    x = x_btf * scale[None, None, :] + shift[None, None, :]

    seq = jnp.transpose(x, (1, 0, 2))  # (T, B, F)
    for lp in params["layers"]:
        H = lp["w_hh_t"].shape[0]

        def step(carry, x_t, lp=lp, H=H):
            h, c = carry
            gates = x_t @ lp["w_ih_t"] + h @ lp["w_hh_t"] + lp["b"]
            i = jax.nn.sigmoid(gates[:, 0 * H:1 * H])
            f = jax.nn.sigmoid(gates[:, 1 * H:2 * H])
            g = jnp.tanh(gates[:, 2 * H:3 * H])
            o = jax.nn.sigmoid(gates[:, 3 * H:4 * H])
            c = f * c + i * g
            h = o * jnp.tanh(c)
            return (h, c), h

        init = (jnp.zeros((B, H), jnp.float32), jnp.zeros((B, H), jnp.float32))
        _, seq = jax.lax.scan(step, init, seq)

    h_last = seq[-1]
    return h_last @ params["fc_w"] + params["fc_b"]


# ----------------------------------- Main -------------------------------------

if __name__ == "__main__":
    input_size, hidden_size, num_layers = 8, 32, 2
    batch, seq_len = 4, 8

    key = jax.random.PRNGKey(0)
    key, pkey, xkey = jax.random.split(key, 3)
    params = init_params(pkey, input_size, hidden_size, num_layers)
    x = jax.random.normal(xkey, (batch, seq_len, input_size), jnp.float32)

    out = jax.block_until_ready(lstm_forward(params, x))
    assert out.shape == (batch, 1), out.shape

    ref = jax.block_until_ready(lstm_forward_ref(params, x))
    assert jnp.allclose(out, ref, atol=1e-4, rtol=1e-4), (out, ref)

    print("KERNEL_OK")
</pallas_src>

<mosaic_0001>
module attributes {stable_mosaic.version = 11 : i64} {
  func.func @_fused_lstm_kernel(%arg0: memref<8x8x128xf32, #tpu.memory_space<vmem>>, %arg1: memref<2x32x128xf32, #tpu.memory_space<vmem>>, %arg2: memref<1x32x128xf32, #tpu.memory_space<vmem>>, %arg3: memref<1x1x128xf32, #tpu.memory_space<vmem>>, %arg4: memref<32x1xf32, #tpu.memory_space<vmem>>, %arg5: memref<1x1xf32, #tpu.memory_space<vmem>>, %arg6: memref<8x1xf32, #tpu.memory_space<vmem>>) attributes {dimension_semantics = [], scalar_prefetch = 0 : i64, scratch_operands = 0 : i64, tpu.core_type = #tpu.core_type<tc>} {
    %c0 = arith.constant 0 : index
    %c0_0 = arith.constant 0 : index
    %c0_1 = arith.constant 0 : index
    %0 = vector.load %arg1[%c0, %c0_0, %c0_1] : memref<2x32x128xf32, #tpu.memory_space<vmem>>, vector<1x32x128xf32>
    %1 = vector.shape_cast %0 : vector<1x32x128xf32> to vector<32x128xf32>
    %c1 = arith.constant 1 : index
    %c0_2 = arith.constant 0 : index
    %c0_3 = arith.constant 0 : index
    %2 = vector.load %arg1[%c1, %c0_2, %c0_3] : memref<2x32x128xf32, #tpu.memory_space<vmem>>, vector<1x32x128xf32>
    %3 = vector.shape_cast %2 : vector<1x32x128xf32> to vector<32x128xf32>
    %c0_4 = arith.constant 0 : index
    %c0_5 = arith.constant 0 : index
    %c0_6 = arith.constant 0 : index
    %4 = vector.load %arg2[%c0_4, %c0_5, %c0_6] : memref<1x32x128xf32, #tpu.memory_space<vmem>>, vector<1x32x128xf32>
    %5 = vector.shape_cast %4 : vector<1x32x128xf32> to vector<32x128xf32>
    %c0_7 = arith.constant 0 : index
    %c0_8 = arith.constant 0 : index
    %c0_9 = arith.constant 0 : index
    %6 = vector.load %arg3[%c0_7, %c0_8, %c0_9] : memref<1x1x128xf32, #tpu.memory_space<vmem>>, vector<1x1x128xf32>
    %7 = vector.shape_cast %6 : vector<1x1x128xf32> to vector<1x128xf32>
    %cst = arith.constant 0.000000e+00 : f32
    %8 = vector.broadcast %cst : f32 to vector<8x32xf32>
    %c0_i32 = arith.constant 0 : i32
    %9 = arith.index_cast %c0_i32 : i32 to index
    %c0_10 = arith.constant 0 : index
    %c0_11 = arith.constant 0 : index
    %10 = vector.load %arg0[%9, %c0_10, %c0_11] : memref<8x8x128xf32, #tpu.memory_space<vmem>>, vector<1x8x128xf32>
    %11 = vector.shape_cast %10 : vector<1x8x128xf32> to vector<8x128xf32>
    %cst_12 = arith.constant dense<0.000000e+00> : vector<8x128xf32>
    %12 = tpu.matmul %8, %1, %cst_12 {dimension_numbers = #tpu.dot_dimension_numbers<[1], [0], [0], [1], [0, 0, 1, 1], [], []>} : vector<8x32xf32>, vector<32x128xf32>, vector<8x128xf32> -> vector<8x128xf32>
    %13 = arith.addf %11, %12 : vector<8x128xf32>
    %14 = vector.extract_strided_slice %13 {offsets = [0, 0], sizes = [8, 32], strides = [1, 1]} : vector<8x128xf32> to vector<8x32xf32>
    %15 = arith.negf %14 : vector<8x32xf32>
    %16 = math.exp %15 : vector<8x32xf32>
    %cst_13 = arith.constant 1.000000e+00 : f32
    %17 = vector.broadcast %cst_13 : f32 to vector<8x32xf32>
    %18 = arith.addf %17, %16 : vector<8x32xf32>
    %19 = arith.divf %17, %18 : vector<8x32xf32>
    %20 = vector.extract_strided_slice %13 {offsets = [0, 32], sizes = [8, 32], strides = [1, 1]} : vector<8x128xf32> to vector<8x32xf32>
    %21 = arith.negf %20 : vector<8x32xf32>
    %22 = math.exp %21 : vector<8x32xf32>
    %cst_14 = arith.constant 1.000000e+00 : f32
    %23 = vector.broadcast %cst_14 : f32 to vector<8x32xf32>
    %24 = arith.addf %23, %22 : vector<8x32xf32>
    %25 = arith.divf %23, %24 : vector<8x32xf32>
    %26 = vector.extract_strided_slice %13 {offsets = [0, 64], sizes = [8, 32], strides = [1, 1]} : vector<8x128xf32> to vector<8x32xf32>
    %27 = math.tanh %26 : vector<8x32xf32>
    %28 = vector.extract_strided_slice %13 {offsets = [0, 96], sizes = [8, 32], strides = [1, 1]} : vector<8x128xf32> to vector<8x32xf32>
    %29 = arith.negf %28 : vector<8x32xf32>
    %30 = math.exp %29 : vector<8x32xf32>
    %cst_15 = arith.constant 1.000000e+00 : f32
    %31 = vector.broadcast %cst_15 : f32 to vector<8x32xf32>
    %32 = arith.addf %31, %30 : vector<8x32xf32>
    %33 = arith.divf %31, %32 : vector<8x32xf32>
    %34 = arith.mulf %25, %8 : vector<8x32xf32>
    %35 = arith.mulf %19, %27 : vector<8x32xf32>
    %36 = arith.addf %34, %35 : vector<8x32xf32>
    %37 = math.tanh %36 : vector<8x32xf32>
    %38 = arith.mulf %33, %37 : vector<8x32xf32>
    %cst_16 = arith.constant dense<0.000000e+00> : vector<8x128xf32>
    %39 = tpu.matmul %38, %5, %cst_16 {dimension_numbers = #tpu.dot_dimension_numbers<[1], [0], [0], [1], [0, 0, 1, 1], [], []>} : vector<8x32xf32>, vector<32x128xf32>, vector<8x128xf32> -> vector<8x128xf32>
    %cst_17 = arith.constant dense<0.000000e+00> : vector<8x128xf32>
    %40 = tpu.matmul %8, %3, %cst_17 {dimension_numbers = #tpu.dot_dimension_numbers<[1], [0], [0], [1], [0, 0, 1, 1], [], []>} : vector<8x32xf32>, vector<32x128xf32>, vector<8x128xf32> -> vector<8x128xf32>
    %41 = arith.addf %39, %40 : vector<8x128xf32>
    %42 = vector.broadcast %7 : vector<1x128xf32> to vector<8x128xf32>
    %43 = arith.addf %41, %42 : vector<8x128xf32>
    %44 = vector.extract_strided_slice %43 {offsets = [0, 0], sizes = [8, 32], strides = [1, 1]} : vector<8x128xf32> to vector<8x32xf32>
    %45 = arith.negf %44 : vector<8x32xf32>
    %46 = math.exp %45 : vector<8x32xf32>
    %cst_18 = arith.constant 1.000000e+00 : f32
    %47 = vector.broadcast %cst_18 : f32 to vector<8x32xf32>
    %48 = arith.addf %47, %46 : vector<8x32xf32>
    %49 = arith.divf %47, %48 : vector<8x32xf32>
    %50 = vector.extract_strided_slice %43 {offsets = [0, 32], sizes = [8, 32], strides = [1, 1]} : vector<8x128xf32> to vector<8x32xf32>
    %51 = arith.negf %50 : vector<8x32xf32>
    %52 = math.exp %51 : vector<8x32xf32>
    %cst_19 = arith.constant 1.000000e+00 : f32
    %53 = vector.broadcast %cst_19 : f32 to vector<8x32xf32>
    %54 = arith.addf %53, %52 : vector<8x32xf32>
    %55 = arith.divf %53, %54 : vector<8x32xf32>
    %56 = vector.extract_strided_slice %43 {offsets = [0, 64], sizes = [8, 32], strides = [1, 1]} : vector<8x128xf32> to vector<8x32xf32>
    %57 = math.tanh %56 : vector<8x32xf32>
    %58 = vector.extract_strided_slice %43 {offsets = [0, 96], sizes = [8, 32], strides = [1, 1]} : vector<8x128xf32> to vector<8x32xf32>
    %59 = arith.negf %58 : vector<8x32xf32>
    %60 = math.exp %59 : vector<8x32xf32>
    %cst_20 = arith.constant 1.000000e+00 : f32
    %61 = vector.broadcast %cst_20 : f32 to vector<8x32xf32>
    %62 = arith.addf %61, %60 : vector<8x32xf32>
    %63 = arith.divf %61, %62 : vector<8x32xf32>
    %64 = arith.mulf %55, %8 : vector<8x32xf32>
    %65 = arith.mulf %49, %57 : vector<8x32xf32>
    %66 = arith.addf %64, %65 : vector<8x32xf32>
    %67 = math.tanh %66 : vector<8x32xf32>
    %68 = arith.mulf %63, %67 : vector<8x32xf32>
    %c1_i32 = arith.constant 1 : i32
    %69 = arith.index_cast %c1_i32 : i32 to index
    %c0_21 = arith.constant 0 : index
    %c0_22 = arith.constant 0 : index
    %70 = vector.load %arg0[%69, %c0_21, %c0_22] : memref<8x8x128xf32, #tpu.memory_space<vmem>>, vector<1x8x128xf32>
    %71 = vector.shape_cast %70 : vector<1x8x128xf32> to vector<8x128xf32>
    %cst_23 = arith.constant dense<0.000000e+00> : vector<8x128xf32>
    %72 = tpu.matmul %38, %1, %cst_23 {dimension_numbers = #tpu.dot_dimension_numbers<[1], [0], [0], [1], [0, 0, 1, 1], [], []>} : vector<8x32xf32>, vector<32x128xf32>, vector<8x128xf32> -> vector<8x128xf32>
    %73 = arith.addf %71, %72 : vector<8x128xf32>
    %74 = vector.extract_strided_slice %73 {offsets = [0, 0], sizes = [8, 32], strides = [1, 1]} : vector<8x128xf32> to vector<8x32xf32>
    %75 = arith.negf %74 : vector<8x32xf32>
    %76 = math.exp %75 : vector<8x32xf32>
    %cst_24 = arith.constant 1.000000e+00 : f32
    %77 = vector.broadcast %cst_24 : f32 to vector<8x32xf32>
    %78 = arith.addf %77, %76 : vector<8x32xf32>
    %79 = arith.divf %77, %78 : vector<8x32xf32>
    %80 = vector.extract_strided_slice %73 {offsets = [0, 32], sizes = [8, 32], strides = [1, 1]} : vector<8x128xf32> to vector<8x32xf32>
    %81 = arith.negf %80 : vector<8x32xf32>
    %82 = math.exp %81 : vector<8x32xf32>
    %cst_25 = arith.constant 1.000000e+00 : f32
    %83 = vector.broadcast %cst_25 : f32 to vector<8x32xf32>
    %84 = arith.addf %83, %82 : vector<8x32xf32>
    %85 = arith.divf %83, %84 : vector<8x32xf32>
    %86 = vector.extract_strided_slice %73 {offsets = [0, 64], sizes = [8, 32], strides = [1, 1]} : vector<8x128xf32> to vector<8x32xf32>
    %87 = math.tanh %86 : vector<8x32xf32>
    %88 = vector.extract_strided_slice %73 {offsets = [0, 96], sizes = [8, 32], strides = [1, 1]} : vector<8x128xf32> to vector<8x32xf32>
    %89 = arith.negf %88 : vector<8x32xf32>
    %90 = math.exp %89 : vector<8x32xf32>
    %cst_26 = arith.constant 1.000000e+00 : f32
    %91 = vector.broadcast %cst_26 : f32 to vector<8x32xf32>
    %92 = arith.addf %91, %90 : vector<8x32xf32>
    %93 = arith.divf %91, %92 : vector<8x32xf32>
    %94 = arith.mulf %85, %36 : vector<8x32xf32>
    %95 = arith.mulf %79, %87 : vector<8x32xf32>
    %96 = arith.addf %94, %95 : vector<8x32xf32>
    %97 = math.tanh %96 : vector<8x32xf32>
    %98 = arith.mulf %93, %97 : vector<8x32xf32>
    %cst_27 = arith.constant dense<0.000000e+00> : vector<8x128xf32>
    %99 = tpu.matmul %98, %5, %cst_27 {dimension_numbers = #tpu.dot_dimension_numbers<[1], [0], [0], [1], [0, 0, 1, 1], [], []>} : vector<8x32xf32>, vector<32x128xf32>, vector<8x128xf32> -> vector<8x128xf32>
    %cst_28 = arith.constant dense<0.000000e+00> : vector<8x128xf32>
    %100 = tpu.matmul %68, %3, %cst_28 {dimension_numbers = #tpu.dot_dimension_numbers<[1], [0], [0], [1], [0, 0, 1, 1], [], []>} : vector<8x32xf32>, vector<32x128xf32>, vector<8x128xf32> -> vector<8x128xf32>
    %101 = arith.addf %99, %100 : vector<8x128xf32>
    %102 = vector.broadcast %7 : vector<1x128xf32> to vector<8x128xf32>
    %103 = arith.addf %101, %102 : vector<8x128xf32>
    %104 = vector.extract_strided_slice %103 {offsets = [0, 0], sizes = [8, 32], strides = [1, 1]} : vector<8x128xf32> to vector<8x32xf32>
    %105 = arith.negf %104 : vector<8x32xf32>
    %106 = math.exp %105 : vector<8x32xf32>
    %cst_29 = arith.constant 1.000000e+00 : f32
    %107 = vector.broadcast %cst_29 : f32 to vector<8x32xf32>
    %108 = arith.addf %107, %106 : vector<8x32xf32>
    %109 = arith.divf %107, %108 : vector<8x32xf32>
    %110 = vector.extract_strided_slice %103 {offsets = [0, 32], sizes = [8, 32], strides = [1, 1]} : vector<8x128xf32> to vector<8x32xf32>
    %111 = arith.negf %110 : vector<8x32xf32>
    %112 = math.exp %111 : vector<8x32xf32>
    %cst_30 = arith.constant 1.000000e+00 : f32
    %113 = vector.broadcast %cst_30 : f32 to vector<8x32xf32>
    %114 = arith.addf %113, %112 : vector<8x32xf32>
    %115 = arith.divf %113, %114 : vector<8x32xf32>
    %116 = vector.extract_strided_slice %103 {offsets = [0, 64], sizes = [8, 32], strides = [1, 1]} : vector<8x128xf32> to vector<8x32xf32>
    %117 = math.tanh %116 : vector<8x32xf32>
    %118 = vector.extract_strided_slice %103 {offsets = [0, 96], sizes = [8, 32], strides = [1, 1]} : vector<8x128xf32> to vector<8x32xf32>
    %119 = arith.negf %118 : vector<8x32xf32>
    %120 = math.exp %119 : vector<8x32xf32>
    %cst_31 = arith.constant 1.000000e+00 : f32
    %121 = vector.broadcast %cst_31 : f32 to vector<8x32xf32>
    %122 = arith.addf %121, %120 : vector<8x32xf32>
    %123 = arith.divf %121, %122 : vector<8x32xf32>
    %124 = arith.mulf %115, %66 : vector<8x32xf32>
    %125 = arith.mulf %109, %117 : vector<8x32xf32>
    %126 = arith.addf %124, %125 : vector<8x32xf32>
    %127 = math.tanh %126 : vector<8x32xf32>
    %128 = arith.mulf %123, %127 : vector<8x32xf32>
    %c2_i32 = arith.constant 2 : i32
    %129 = arith.index_cast %c2_i32 : i32 to index
    %c0_32 = arith.constant 0 : index
    %c0_33 = arith.constant 0 : index
    %130 = vector.load %arg0[%129, %c0_32, %c0_33] : memref<8x8x128xf32, #tpu.memory_space<vmem>>, vector<1x8x128xf32>
    %131 = vector.shape_cast %130 : vector<1x8x128xf32> to vector<8x128xf32>
    %cst_34 = arith.constant dense<0.000000e+00> : vector<8x128xf32>
    %132 = tpu.matmul %98, %1, %cst_34 {dimension_numbers = #tpu.dot_dimension_numbers<[1], [0], [0], [1], [0, 0, 1, 1], [], []>} : vector<8x32xf32>, vector<32x128xf32>, vector<8x128xf32> -> vector<8x128xf32>
    %133 = arith.addf %131, %132 : vector<8x128xf32>
    %134 = vector.extract_strided_slice %133 {offsets = [0, 0], sizes = [8, 32], strides = [1, 1]} : vector<8x128xf32> to vector<8x32xf32>
    %135 = arith.negf %134 : vector<8x32xf32>
    %136 = math.exp %135 : vector<8x32xf32>
    %cst_35 = arith.constant 1.000000e+00 : f32
    %137 = vector.broadcast %cst_35 : f32 to vector<8x32xf32>
    %138 = arith.addf %137, %136 : vector<8x32xf32>
    %139 = arith.divf %137, %138 : vector<8x32xf32>
    %140 = vector.extract_strided_slice %133 {offsets = [0, 32], sizes = [8, 32], strides = [1, 1]} : vector<8x128xf32> to vector<8x32xf32>
    %141 = arith.negf %140 : vector<8x32xf32>
    %142 = math.exp %141 : vector<8x32xf32>
    %cst_36 = arith.constant 1.000000e+00 : f32
    %143 = vector.broadcast %cst_36 : f32 to vector<8x32xf32>
    %144 = arith.addf %143, %142 : vector<8x32xf32>
    %145 = arith.divf %143, %144 : vector<8x32xf32>
    %146 = vector.extract_strided_slice %133 {offsets = [0, 64], sizes = [8, 32], strides = [1, 1]} : vector<8x128xf32> to vector<8x32xf32>
    %147 = math.tanh %146 : vector<8x32xf32>
    %148 = vector.extract_strided_slice %133 {offsets = [0, 96], sizes = [8, 32], strides = [1, 1]} : vector<8x128xf32> to vector<8x32xf32>
    %149 = arith.negf %148 : vector<8x32xf32>
    %150 = math.exp %149 : vector<8x32xf32>
    %cst_37 = arith.constant 1.000000e+00 : f32
    %151 = vector.broadcast %cst_37 : f32 to vector<8x32xf32>
    %152 = arith.addf %151, %150 : vector<8x32xf32>
    %153 = arith.divf %151, %152 : vector<8x32xf32>
    %154 = arith.mulf %145, %96 : vector<8x32xf32>
    %155 = arith.mulf %139, %147 : vector<8x32xf32>
    %156 = arith.addf %154, %155 : vector<8x32xf32>
    %157 = math.tanh %156 : vector<8x32xf32>
    %158 = arith.mulf %153, %157 : vector<8x32xf32>
    %cst_38 = arith.constant dense<0.000000e+00> : vector<8x128xf32>
    %159 = tpu.matmul %158, %5, %cst_38 {dimension_numbers = #tpu.dot_dimension_numbers<[1], [0], [0], [1], [0, 0, 1, 1], [], []>} : vector<8x32xf32>, vector<32x128xf32>, vector<8x128xf32> -> vector<8x128xf32>
    %cst_39 = arith.constant dense<0.000000e+00> : vector<8x128xf32>
    %160 = tpu.matmul %128, %3, %cst_39 {dimension_numbers = #tpu.dot_dimension_numbers<[1], [0], [0], [1], [0, 0, 1, 1], [], []>} : vector<8x32xf32>, vector<32x128xf32>, vector<8x128xf32> -> vector<8x128xf32>
    %161 = arith.addf %159, %160 : vector<8x128xf32>
    %162 = vector.broadcast %7 : vector<1x128xf32> to vector<8x128xf32>
    %163 = arith.addf %161, %162 : vector<8x128xf32>
    %164 = vector.extract_strided_slice %163 {offsets = [0, 0], sizes = [8, 32], strides = [1, 1]} : vector<8x128xf32> to vector<8x32xf32>
    %165 = arith.negf %164 : vector<8x32xf32>
    %166 = math.exp %165 : vector<8x32xf32>
    %cst_40 = arith.constant 1.000000e+00 : f32
    %167 = vector.broadcast %cst_40 : f32 to vector<8x32xf32>
    %168 = arith.addf %167, %166 : vector<8x32xf32>
    %169 = arith.divf %167, %168 : vector<8x32xf32>
    %170 = vector.extract_strided_slice %163 {offsets = [0, 32], sizes = [8, 32], strides = [1, 1]} : vector<8x128xf32> to vector<8x32xf32>
    %171 = arith.negf %170 : vector<8x32xf32>
    %172 = math.exp %171 : vector<8x32xf32>
    %cst_41 = arith.constant 1.000000e+00 : f32
    %173 = vector.broadcast %cst_41 : f32 to vector<8x32xf32>
    %174 = arith.addf %173, %172 : vector<8x32xf32>
    %175 = arith.divf %173, %174 : vector<8x32xf32>
    %176 = vector.extract_strided_slice %163 {offsets = [0, 64], sizes = [8, 32], strides = [1, 1]} : vector<8x128xf32> to vector<8x32xf32>
    %177 = math.tanh %176 : vector<8x32xf32>
    %178 = vector.extract_strided_slice %163 {offsets = [0, 96], sizes = [8, 32], strides = [1, 1]} : vector<8x128xf32> to vector<8x32xf32>
    %179 = arith.negf %178 : vector<8x32xf32>
    %180 = math.exp %179 : vector<8x32xf32>
    %cst_42 = arith.constant 1.000000e+00 : f32
    %181 = vector.broadcast %cst_42 : f32 to vector<8x32xf32>
    %182 = arith.addf %181, %180 : vector<8x32xf32>
    %183 = arith.divf %181, %182 : vector<8x32xf32>
    %184 = arith.mulf %175, %126 : vector<8x32xf32>
    %185 = arith.mulf %169, %177 : vector<8x32xf32>
    %186 = arith.addf %184, %185 : vector<8x32xf32>
    %187 = math.tanh %186 : vector<8x32xf32>
    %188 = arith.mulf %183, %187 : vector<8x32xf32>
    %c3_i32 = arith.constant 3 : i32
    %189 = arith.index_cast %c3_i32 : i32 to index
    %c0_43 = arith.constant 0 : index
    %c0_44 = arith.constant 0 : index
    %190 = vector.load %arg0[%189, %c0_43, %c0_44] : memref<8x8x128xf32, #tpu.memory_space<vmem>>, vector<1x8x128xf32>
    %191 = vector.shape_cast %190 : vector<1x8x128xf32> to vector<8x128xf32>
    %cst_45 = arith.constant dense<0.000000e+00> : vector<8x128xf32>
    %192 = tpu.matmul %158, %1, %cst_45 {dimension_numbers = #tpu.dot_dimension_numbers<[1], [0], [0], [1], [0, 0, 1, 1], [], []>} : vector<8x32xf32>, vector<32x128xf32>, vector<8x128xf32> -> vector<8x128xf32>
    %193 = arith.addf %191, %192 : vector<8x128xf32>
    %194 = vector.extract_strided_slice %193 {offsets = [0, 0], sizes = [8, 32], strides = [1, 1]} : vector<8x128xf32> to vector<8x32xf32>
    %195 = arith.negf %194 : vector<8x32xf32>
    %196 = math.exp %195 : vector<8x32xf32>
    %cst_46 = arith.constant 1.000000e+00 : f32
    %197 = vector.broadcast %cst_46 : f32 to vector<8x32xf32>
    %198 = arith.addf %197, %196 : vector<8x32xf32>
    %199 = arith.divf %197, %198 : vector<8x32xf32>
    %200 = vector.extract_strided_slice %193 {offsets = [0, 32], sizes = [8, 32], strides = [1, 1]} : vector<8x128xf32> to vector<8x32xf32>
    %201 = arith.negf %200 : vector<8x32xf32>
    %202 = math.exp %201 : vector<8x32xf32>
    %cst_47 = arith.constant 1.000000e+00 : f32
    %203 = vector.broadcast %cst_47 : f32 to vector<8x32xf32>
    %204 = arith.addf %203, %202 : vector<8x32xf32>
    %205 = arith.divf %203, %204 : vector<8x32xf32>
    %206 = vector.extract_strided_slice %193 {offsets = [0, 64], sizes = [8, 32], strides = [1, 1]} : vector<8x128xf32> to vector<8x32xf32>
    %207 = math.tanh %206 : vector<8x32xf32>
    %208 = vector.extract_strided_slice %193 {offsets = [0, 96], sizes = [8, 32], strides = [1, 1]} : vector<8x128xf32> to vector<8x32xf32>
    %209 = arith.negf %208 : vector<8x32xf32>
    %210 = math.exp %209 : vector<8x32xf32>
    %cst_48 = arith.constant 1.000000e+00 : f32
    %211 = vector.broadcast %cst_48 : f32 to vector<8x32xf32>
    %212 = arith.addf %211, %210 : vector<8x32xf32>
    %213 = arith.divf %211, %212 : vector<8x32xf32>
    %214 = arith.mulf %205, %156 : vector<8x32xf32>
    %215 = arith.mulf %199, %207 : vector<8x32xf32>
    %216 = arith.addf %214, %215 : vector<8x32xf32>
    %217 = math.tanh %216 : vector<8x32xf32>
    %218 = arith.mulf %213, %217 : vector<8x32xf32>
    %cst_49 = arith.constant dense<0.000000e+00> : vector<8x128xf32>
    %219 = tpu.matmul %218, %5, %cst_49 {dimension_numbers = #tpu.dot_dimension_numbers<[1], [0], [0], [1], [0, 0, 1, 1], [], []>} : vector<8x32xf32>, vector<32x128xf32>, vector<8x128xf32> -> vector<8x128xf32>
    %cst_50 = arith.constant dense<0.000000e+00> : vector<8x128xf32>
    %220 = tpu.matmul %188, %3, %cst_50 {dimension_numbers = #tpu.dot_dimension_numbers<[1], [0], [0], [1], [0, 0, 1, 1], [], []>} : vector<8x32xf32>, vector<32x128xf32>, vector<8x128xf32> -> vector<8x128xf32>
    %221 = arith.addf %219, %220 : vector<8x128xf32>
    %222 = vector.broadcast %7 : vector<1x128xf32> to vector<8x128xf32>
    %223 = arith.addf %221, %222 : vector<8x128xf32>
    %224 = vector.extract_strided_slice %223 {offsets = [0, 0], sizes = [8, 32], strides = [1, 1]} : vector<8x128xf32> to vector<8x32xf32>
    %225 = arith.negf %224 : vector<8x32xf32>
    %226 = math.exp %225 : vector<8x32xf32>
    %cst_51 = arith.constant 1.000000e+00 : f32
    %227 = vector.broadcast %cst_51 : f32 to vector<8x32xf32>
    %228 = arith.addf %227, %226 : vector<8x32xf32>
    %229 = arith.divf %227, %228 : vector<8x32xf32>
    %230 = vector.extract_strided_slice %223 {offsets = [0, 32], sizes = [8, 32], strides = [1, 1]} : vector<8x128xf32> to vector<8x32xf32>
    %231 = arith.negf %230 : vector<8x32xf32>
    %232 = math.exp %231 : vector<8x32xf32>
    %cst_52 = arith.constant 1.000000e+00 : f32
    %233 = vector.broadcast %cst_52 : f32 to vector<8x32xf32>
    %234 = arith.addf %233, %232 : vector<8x32xf32>
    %235 = arith.divf %233, %234 : vector<8x32xf32>
    %236 = vector.extract_strided_slice %223 {offsets = [0, 64], sizes = [8, 32], strides = [1, 1]} : vector<8x128xf32> to vector<8x32xf32>
    %237 = math.tanh %236 : vector<8x32xf32>
    %238 = vector.extract_strided_slice %223 {offsets = [0, 96], sizes = [8, 32], strides = [1, 1]} : vector<8x128xf32> to vector<8x32xf32>
    %239 = arith.negf %238 : vector<8x32xf32>
    %240 = math.exp %239 : vector<8x32xf32>
    %cst_53 = arith.constant 1.000000e+00 : f32
    %241 = vector.broadcast %cst_53 : f32 to vector<8x32xf32>
    %242 = arith.addf %241, %240 : vector<8x32xf32>
    %243 = arith.divf %241, %242 : vector<8x32xf32>
    %244 = arith.mulf %235, %186 : vector<8x32xf32>
    %245 = arith.mulf %229, %237 : vector<8x32xf32>
    %246 = arith.addf %244, %245 : vector<8x32xf32>
    %247 = math.tanh %246 : vector<8x32xf32>
    %248 = arith.mulf %243, %247 : vector<8x32xf32>
    %c4_i32 = arith.constant 4 : i32
    %249 = arith.index_cast %c4_i32 : i32 to index
    %c0_54 = arith.constant 0 : index
    %c0_55 = arith.constant 0 : index
    %250 = vector.load %arg0[%249, %c0_54, %c0_55] : memref<8x8x128xf32, #tpu.memory_space<vmem>>, vector<1x8x128xf32>
    %251 = vector.shape_cast %250 : vector<1x8x128xf32> to vector<8x128xf32>
    %cst_56 = arith.constant dense<0.000000e+00> : vector<8x128xf32>
    %252 = tpu.matmul %218, %1, %cst_56 {dimension_numbers = #tpu.dot_dimension_numbers<[1], [0], [0], [1], [0, 0, 1, 1], [], []>} : vector<8x32xf32>, vector<32x128xf32>, vector<8x128xf32> -> vector<8x128xf32>
    %253 = arith.addf %251, %252 : vector<8x128xf32>
    %254 = vector.extract_strided_slice %253 {offsets = [0, 0], sizes = [8, 32], strides = [1, 1]} : vector<8x128xf32> to vector<8x32xf32>
    %255 = arith.negf %254 : vector<8x32xf32>
    %256 = math.exp %255 : vector<8x32xf32>
    %cst_57 = arith.constant 1.000000e+00 : f32
    %257 = vector.broadcast %cst_57 : f32 to vector<8x32xf32>
    %258 = arith.addf %257, %256 : vector<8x32xf32>
    %259 = arith.divf %257, %258 : vector<8x32xf32>
    %260 = vector.extract_strided_slice %253 {offsets = [0, 32], sizes = [8, 32], strides = [1, 1]} : vector<8x128xf32> to vector<8x32xf32>
    %261 = arith.negf %260 : vector<8x32xf32>
    %262 = math.exp %261 : vector<8x32xf32>
    %cst_58 = arith.constant 1.000000e+00 : f32
    %263 = vector.broadcast %cst_58 : f32 to vector<8x32xf32>
    %264 = arith.addf %263, %262 : vector<8x32xf32>
    %265 = arith.divf %263, %264 : vector<8x32xf32>
    %266 = vector.extract_strided_slice %253 {offsets = [0, 64], sizes = [8, 32], strides = [1, 1]} : vector<8x128xf32> to vector<8x32xf32>
    %267 = math.tanh %266 : vector<8x32xf32>
    %268 = vector.extract_strided_slice %253 {offsets = [0, 96], sizes = [8, 32], strides = [1, 1]} : vector<8x128xf32> to vector<8x32xf32>
    %269 = arith.negf %268 : vector<8x32xf32>
    %270 = math.exp %269 : vector<8x32xf32>
    %cst_59 = arith.constant 1.000000e+00 : f32
    %271 = vector.broadcast %cst_59 : f32 to vector<8x32xf32>
    %272 = arith.addf %271, %270 : vector<8x32xf32>
    %273 = arith.divf %271, %272 : vector<8x32xf32>
    %274 = arith.mulf %265, %216 : vector<8x32xf32>
    %275 = arith.mulf %259, %267 : vector<8x32xf32>
    %276 = arith.addf %274, %275 : vector<8x32xf32>
    %277 = math.tanh %276 : vector<8x32xf32>
    %278 = arith.mulf %273, %277 : vector<8x32xf32>
    %cst_60 = arith.constant dense<0.000000e+00> : vector<8x128xf32>
    %279 = tpu.matmul %278, %5, %cst_60 {dimension_numbers = #tpu.dot_dimension_numbers<[1], [0], [0], [1], [0, 0, 1, 1], [], []>} : vector<8x32xf32>, vector<32x128xf32>, vector<8x128xf32> -> vector<8x128xf32>
    %cst_61 = arith.constant dense<0.000000e+00> : vector<8x128xf32>
    %280 = tpu.matmul %248, %3, %cst_61 {dimension_numbers = #tpu.dot_dimension_numbers<[1], [0], [0], [1], [0, 0, 1, 1], [], []>} : vector<8x32xf32>, vector<32x128xf32>, vector<8x128xf32> -> vector<8x128xf32>
    %281 = arith.addf %279, %280 : vector<8x128xf32>
    %282 = vector.broadcast %7 : vector<1x128xf32> to vector<8x128xf32>
    %283 = arith.addf %281, %282 : vector<8x128xf32>
    %284 = vector.extract_strided_slice %283 {offsets = [0, 0], sizes = [8, 32], strides = [1, 1]} : vector<8x128xf32> to vector<8x32xf32>
    %285 = arith.negf %284 : vector<8x32xf32>
    %286 = math.exp %285 : vector<8x32xf32>
    %cst_62 = arith.constant 1.000000e+00 : f32
    %287 = vector.broadcast %cst_62 : f32 to vector<8x32xf32>
    %288 = arith.addf %287, %286 : vector<8x32xf32>
    %289 = arith.divf %287, %288 : vector<8x32xf32>
    %290 = vector.extract_strided_slice %283 {offsets = [0, 32], sizes = [8, 32], strides = [1, 1]} : vector<8x128xf32> to vector<8x32xf32>
    %291 = arith.negf %290 : vector<8x32xf32>
    %292 = math.exp %291 : vector<8x32xf32>
    %cst_63 = arith.constant 1.000000e+00 : f32
    %293 = vector.broadcast %cst_63 : f32 to vector<8x32xf32>
    %294 = arith.addf %293, %292 : vector<8x32xf32>
    %295 = arith.divf %293, %294 : vector<8x32xf32>
    %296 = vector.extract_strided_slice %283 {offsets = [0, 64], sizes = [8, 32], strides = [1, 1]} : vector<8x128xf32> to vector<8x32xf32>
    %297 = math.tanh %296 : vector<8x32xf32>
    %298 = vector.extract_strided_slice %283 {offsets = [0, 96], sizes = [8, 32], strides = [1, 1]} : vector<8x128xf32> to vector<8x32xf32>
    %299 = arith.negf %298 : vector<8x32xf32>
    %300 = math.exp %299 : vector<8x32xf32>
    %cst_64 = arith.constant 1.000000e+00 : f32
    %301 = vector.broadcast %cst_64 : f32 to vector<8x32xf32>
    %302 = arith.addf %301, %300 : vector<8x32xf32>
    %303 = arith.divf %301, %302 : vector<8x32xf32>
    %304 = arith.mulf %295, %246 : vector<8x32xf32>
    %305 = arith.mulf %289, %297 : vector<8x32xf32>
    %306 = arith.addf %304, %305 : vector<8x32xf32>
    %307 = math.tanh %306 : vector<8x32xf32>
    %308 = arith.mulf %303, %307 : vector<8x32xf32>
    %c5_i32 = arith.constant 5 : i32
    %309 = arith.index_cast %c5_i32 : i32 to index
    %c0_65 = arith.constant 0 : index
    %c0_66 = arith.constant 0 : index
    %310 = vector.load %arg0[%309, %c0_65, %c0_66] : memref<8x8x128xf32, #tpu.memory_space<vmem>>, vector<1x8x128xf32>
    %311 = vector.shape_cast %310 : vector<1x8x128xf32> to vector<8x128xf32>
    %cst_67 = arith.constant dense<0.000000e+00> : vector<8x128xf32>
    %312 = tpu.matmul %278, %1, %cst_67 {dimension_numbers = #tpu.dot_dimension_numbers<[1], [0], [0], [1], [0, 0, 1, 1], [], []>} : vector<8x32xf32>, vector<32x128xf32>, vector<8x128xf32> -> vector<8x128xf32>
    %313 = arith.addf %311, %312 : vector<8x128xf32>
    %314 = vector.extract_strided_slice %313 {offsets = [0, 0], sizes = [8, 32], strides = [1, 1]} : vector<8x128xf32> to vector<8x32xf32>
    %315 = arith.negf %314 : vector<8x32xf32>
    %316 = math.exp %315 : vector<8x32xf32>
    %cst_68 = arith.constant 1.000000e+00 : f32
    %317 = vector.broadcast %cst_68 : f32 to vector<8x32xf32>
    %318 = arith.addf %317, %316 : vector<8x32xf32>
    %319 = arith.divf %317, %318 : vector<8x32xf32>
    %320 = vector.extract_strided_slice %313 {offsets = [0, 32], sizes = [8, 32], strides = [1, 1]} : vector<8x128xf32> to vector<8x32xf32>
    %321 = arith.negf %320 : vector<8x32xf32>
    %322 = math.exp %321 : vector<8x32xf32>
    %cst_69 = arith.constant 1.000000e+00 : f32
    %323 = vector.broadcast %cst_69 : f32 to vector<8x32xf32>
    %324 = arith.addf %323, %322 : vector<8x32xf32>
    %325 = arith.divf %323, %324 : vector<8x32xf32>
    %326 = vector.extract_strided_slice %313 {offsets = [0, 64], sizes = [8, 32], strides = [1, 1]} : vector<8x128xf32> to vector<8x32xf32>
    %327 = math.tanh %326 : vector<8x32xf32>
    %328 = vector.extract_strided_slice %313 {offsets = [0, 96], sizes = [8, 32], strides = [1, 1]} : vector<8x128xf32> to vector<8x32xf32>
    %329 = arith.negf %328 : vector<8x32xf32>
    %330 = math.exp %329 : vector<8x32xf32>
    %cst_70 = arith.constant 1.000000e+00 : f32
    %331 = vector.broadcast %cst_70 : f32 to vector<8x32xf32>
    %332 = arith.addf %331, %330 : vector<8x32xf32>
    %333 = arith.divf %331, %332 : vector<8x32xf32>
    %334 = arith.mulf %325, %276 : vector<8x32xf32>
    %335 = arith.mulf %319, %327 : vector<8x32xf32>
    %336 = arith.addf %334, %335 : vector<8x32xf32>
    %337 = math.tanh %336 : vector<8x32xf32>
    %338 = arith.mulf %333, %337 : vector<8x32xf32>
    %cst_71 = arith.constant dense<0.000000e+00> : vector<8x128xf32>
    %339 = tpu.matmul %338, %5, %cst_71 {dimension_numbers = #tpu.dot_dimension_numbers<[1], [0], [0], [1], [0, 0, 1, 1], [], []>} : vector<8x32xf32>, vector<32x128xf32>, vector<8x128xf32> -> vector<8x128xf32>
    %cst_72 = arith.constant dense<0.000000e+00> : vector<8x128xf32>
    %340 = tpu.matmul %308, %3, %cst_72 {dimension_numbers = #tpu.dot_dimension_numbers<[1], [0], [0], [1], [0, 0, 1, 1], [], []>} : vector<8x32xf32>, vector<32x128xf32>, vector<8x128xf32> -> vector<8x128xf32>
    %341 = arith.addf %339, %340 : vector<8x128xf32>
    %342 = vector.broadcast %7 : vector<1x128xf32> to vector<8x128xf32>
    %343 = arith.addf %341, %342 : vector<8x128xf32>
    %344 = vector.extract_strided_slice %343 {offsets = [0, 0], sizes = [8, 32], strides = [1, 1]} : vector<8x128xf32> to vector<8x32xf32>
    %345 = arith.negf %344 : vector<8x32xf32>
    %346 = math.exp %345 : vector<8x32xf32>
    %cst_73 = arith.constant 1.000000e+00 : f32
    %347 = vector.broadcast %cst_73 : f32 to vector<8x32xf32>
    %348 = arith.addf %347, %346 : vector<8x32xf32>
    %349 = arith.divf %347, %348 : vector<8x32xf32>
    %350 = vector.extract_strided_slice %343 {offsets = [0, 32], sizes = [8, 32], strides = [1, 1]} : vector<8x128xf32> to vector<8x32xf32>
    %351 = arith.negf %350 : vector<8x32xf32>
    %352 = math.exp %351 : vector<8x32xf32>
    %cst_74 = arith.constant 1.000000e+00 : f32
    %353 = vector.broadcast %cst_74 : f32 to vector<8x32xf32>
    %354 = arith.addf %353, %352 : vector<8x32xf32>
    %355 = arith.divf %353, %354 : vector<8x32xf32>
    %356 = vector.extract_strided_slice %343 {offsets = [0, 64], sizes = [8, 32], strides = [1, 1]} : vector<8x128xf32> to vector<8x32xf32>
    %357 = math.tanh %356 : vector<8x32xf32>
    %358 = vector.extract_strided_slice %343 {offsets = [0, 96], sizes = [8, 32], strides = [1, 1]} : vector<8x128xf32> to vector<8x32xf32>
    %359 = arith.negf %358 : vector<8x32xf32>
    %360 = math.exp %359 : vector<8x32xf32>
    %cst_75 = arith.constant 1.000000e+00 : f32
    %361 = vector.broadcast %cst_75 : f32 to vector<8x32xf32>
    %362 = arith.addf %361, %360 : vector<8x32xf32>
    %363 = arith.divf %361, %362 : vector<8x32xf32>
    %364 = arith.mulf %355, %306 : vector<8x32xf32>
    %365 = arith.mulf %349, %357 : vector<8x32xf32>
    %366 = arith.addf %364, %365 : vector<8x32xf32>
    %367 = math.tanh %366 : vector<8x32xf32>
    %368 = arith.mulf %363, %367 : vector<8x32xf32>
    %c6_i32 = arith.constant 6 : i32
    %369 = arith.index_cast %c6_i32 : i32 to index
    %c0_76 = arith.constant 0 : index
    %c0_77 = arith.constant 0 : index
    %370 = vector.load %arg0[%369, %c0_76, %c0_77] : memref<8x8x128xf32, #tpu.memory_space<vmem>>, vector<1x8x128xf32>
    %371 = vector.shape_cast %370 : vector<1x8x128xf32> to vector<8x128xf32>
    %cst_78 = arith.constant dense<0.000000e+00> : vector<8x128xf32>
    %372 = tpu.matmul %338, %1, %cst_78 {dimension_numbers = #tpu.dot_dimension_numbers<[1], [0], [0], [1], [0, 0, 1, 1], [], []>} : vector<8x32xf32>, vector<32x128xf32>, vector<8x128xf32> -> vector<8x128xf32>
    %373 = arith.addf %371, %372 : vector<8x128xf32>
    %374 = vector.extract_strided_slice %373 {offsets = [0, 0], sizes = [8, 32], strides = [1, 1]} : vector<8x128xf32> to vector<8x32xf32>
    %375 = arith.negf %374 : vector<8x32xf32>
    %376 = math.exp %375 : vector<8x32xf32>
    %cst_79 = arith.constant 1.000000e+00 : f32
    %377 = vector.broadcast %cst_79 : f32 to vector<8x32xf32>
    %378 = arith.addf %377, %376 : vector<8x32xf32>
    %379 = arith.divf %377, %378 : vector<8x32xf32>
    %380 = vector.extract_strided_slice %373 {offsets = [0, 32], sizes = [8, 32], strides = [1, 1]} : vector<8x128xf32> to vector<8x32xf32>
    %381 = arith.negf %380 : vector<8x32xf32>
    %382 = math.exp %381 : vector<8x32xf32>
    %cst_80 = arith.constant 1.000000e+00 : f32
    %383 = vector.broadcast %cst_80 : f32 to vector<8x32xf32>
    %384 = arith.addf %383, %382 : vector<8x32xf32>
    %385 = arith.divf %383, %384 : vector<8x32xf32>
    %386 = vector.extract_strided_slice %373 {offsets = [0, 64], sizes = [8, 32], strides = [1, 1]} : vector<8x128xf32> to vector<8x32xf32>
    %387 = math.tanh %386 : vector<8x32xf32>
    %388 = vector.extract_strided_slice %373 {offsets = [0, 96], sizes = [8, 32], strides = [1, 1]} : vector<8x128xf32> to vector<8x32xf32>
    %389 = arith.negf %388 : vector<8x32xf32>
    %390 = math.exp %389 : vector<8x32xf32>
    %cst_81 = arith.constant 1.000000e+00 : f32
    %391 = vector.broadcast %cst_81 : f32 to vector<8x32xf32>
    %392 = arith.addf %391, %390 : vector<8x32xf32>
    %393 = arith.divf %391, %392 : vector<8x32xf32>
    %394 = arith.mulf %385, %336 : vector<8x32xf32>
    %395 = arith.mulf %379, %387 : vector<8x32xf32>
    %396 = arith.addf %394, %395 : vector<8x32xf32>
    %397 = math.tanh %396 : vector<8x32xf32>
    %398 = arith.mulf %393, %397 : vector<8x32xf32>
    %cst_82 = arith.constant dense<0.000000e+00> : vector<8x128xf32>
    %399 = tpu.matmul %398, %5, %cst_82 {dimension_numbers = #tpu.dot_dimension_numbers<[1], [0], [0], [1], [0, 0, 1, 1], [], []>} : vector<8x32xf32>, vector<32x128xf32>, vector<8x128xf32> -> vector<8x128xf32>
    %cst_83 = arith.constant dense<0.000000e+00> : vector<8x128xf32>
    %400 = tpu.matmul %368, %3, %cst_83 {dimension_numbers = #tpu.dot_dimension_numbers<[1], [0], [0], [1], [0, 0, 1, 1], [], []>} : vector<8x32xf32>, vector<32x128xf32>, vector<8x128xf32> -> vector<8x128xf32>
    %401 = arith.addf %399, %400 : vector<8x128xf32>
    %402 = vector.broadcast %7 : vector<1x128xf32> to vector<8x128xf32>
    %403 = arith.addf %401, %402 : vector<8x128xf32>
    %404 = vector.extract_strided_slice %403 {offsets = [0, 0], sizes = [8, 32], strides = [1, 1]} : vector<8x128xf32> to vector<8x32xf32>
    %405 = arith.negf %404 : vector<8x32xf32>
    %406 = math.exp %405 : vector<8x32xf32>
    %cst_84 = arith.constant 1.000000e+00 : f32
    %407 = vector.broadcast %cst_84 : f32 to vector<8x32xf32>
    %408 = arith.addf %407, %406 : vector<8x32xf32>
    %409 = arith.divf %407, %408 : vector<8x32xf32>
    %410 = vector.extract_strided_slice %403 {offsets = [0, 32], sizes = [8, 32], strides = [1, 1]} : vector<8x128xf32> to vector<8x32xf32>
    %411 = arith.negf %410 : vector<8x32xf32>
    %412 = math.exp %411 : vector<8x32xf32>
    %cst_85 = arith.constant 1.000000e+00 : f32
    %413 = vector.broadcast %cst_85 : f32 to vector<8x32xf32>
    %414 = arith.addf %413, %412 : vector<8x32xf32>
    %415 = arith.divf %413, %414 : vector<8x32xf32>
    %416 = vector.extract_strided_slice %403 {offsets = [0, 64], sizes = [8, 32], strides = [1, 1]} : vector<8x128xf32> to vector<8x32xf32>
    %417 = math.tanh %416 : vector<8x32xf32>
    %418 = vector.extract_strided_slice %403 {offsets = [0, 96], sizes = [8, 32], strides = [1, 1]} : vector<8x128xf32> to vector<8x32xf32>
    %419 = arith.negf %418 : vector<8x32xf32>
    %420 = math.exp %419 : vector<8x32xf32>
    %cst_86 = arith.constant 1.000000e+00 : f32
    %421 = vector.broadcast %cst_86 : f32 to vector<8x32xf32>
    %422 = arith.addf %421, %420 : vector<8x32xf32>
    %423 = arith.divf %421, %422 : vector<8x32xf32>
    %424 = arith.mulf %415, %366 : vector<8x32xf32>
    %425 = arith.mulf %409, %417 : vector<8x32xf32>
    %426 = arith.addf %424, %425 : vector<8x32xf32>
    %427 = math.tanh %426 : vector<8x32xf32>
    %428 = arith.mulf %423, %427 : vector<8x32xf32>
    %c7_i32 = arith.constant 7 : i32
    %429 = arith.index_cast %c7_i32 : i32 to index
    %c0_87 = arith.constant 0 : index
    %c0_88 = arith.constant 0 : index
    %430 = vector.load %arg0[%429, %c0_87, %c0_88] : memref<8x8x128xf32, #tpu.memory_space<vmem>>, vector<1x8x128xf32>
    %431 = vector.shape_cast %430 : vector<1x8x128xf32> to vector<8x128xf32>
    %cst_89 = arith.constant dense<0.000000e+00> : vector<8x128xf32>
    %432 = tpu.matmul %398, %1, %cst_89 {dimension_numbers = #tpu.dot_dimension_numbers<[1], [0], [0], [1], [0, 0, 1, 1], [], []>} : vector<8x32xf32>, vector<32x128xf32>, vector<8x128xf32> -> vector<8x128xf32>
    %433 = arith.addf %431, %432 : vector<8x128xf32>
    %434 = vector.extract_strided_slice %433 {offsets = [0, 0], sizes = [8, 32], strides = [1, 1]} : vector<8x128xf32> to vector<8x32xf32>
    %435 = arith.negf %434 : vector<8x32xf32>
    %436 = math.exp %435 : vector<8x32xf32>
    %cst_90 = arith.constant 1.000000e+00 : f32
    %437 = vector.broadcast %cst_90 : f32 to vector<8x32xf32>
    %438 = arith.addf %437, %436 : vector<8x32xf32>
    %439 = arith.divf %437, %438 : vector<8x32xf32>
    %440 = vector.extract_strided_slice %433 {offsets = [0, 32], sizes = [8, 32], strides = [1, 1]} : vector<8x128xf32> to vector<8x32xf32>
    %441 = arith.negf %440 : vector<8x32xf32>
    %442 = math.exp %441 : vector<8x32xf32>
    %cst_91 = arith.constant 1.000000e+00 : f32
    %443 = vector.broadcast %cst_91 : f32 to vector<8x32xf32>
    %444 = arith.addf %443, %442 : vector<8x32xf32>
    %445 = arith.divf %443, %444 : vector<8x32xf32>
    %446 = vector.extract_strided_slice %433 {offsets = [0, 64], sizes = [8, 32], strides = [1, 1]} : vector<8x128xf32> to vector<8x32xf32>
    %447 = math.tanh %446 : vector<8x32xf32>
    %448 = vector.extract_strided_slice %433 {offsets = [0, 96], sizes = [8, 32], strides = [1, 1]} : vector<8x128xf32> to vector<8x32xf32>
    %449 = arith.negf %448 : vector<8x32xf32>
    %450 = math.exp %449 : vector<8x32xf32>
    %cst_92 = arith.constant 1.000000e+00 : f32
    %451 = vector.broadcast %cst_92 : f32 to vector<8x32xf32>
    %452 = arith.addf %451, %450 : vector<8x32xf32>
    %453 = arith.divf %451, %452 : vector<8x32xf32>
    %454 = arith.mulf %445, %396 : vector<8x32xf32>
    %455 = arith.mulf %439, %447 : vector<8x32xf32>
    %456 = arith.addf %454, %455 : vector<8x32xf32>
    %457 = math.tanh %456 : vector<8x32xf32>
    %458 = arith.mulf %453, %457 : vector<8x32xf32>
    %cst_93 = arith.constant dense<0.000000e+00> : vector<8x128xf32>
    %459 = tpu.matmul %458, %5, %cst_93 {dimension_numbers = #tpu.dot_dimension_numbers<[1], [0], [0], [1], [0, 0, 1, 1], [], []>} : vector<8x32xf32>, vector<32x128xf32>, vector<8x128xf32> -> vector<8x128xf32>
    %cst_94 = arith.constant dense<0.000000e+00> : vector<8x128xf32>
    %460 = tpu.matmul %428, %3, %cst_94 {dimension_numbers = #tpu.dot_dimension_numbers<[1], [0], [0], [1], [0, 0, 1, 1], [], []>} : vector<8x32xf32>, vector<32x128xf32>, vector<8x128xf32> -> vector<8x128xf32>
    %461 = arith.addf %459, %460 : vector<8x128xf32>
    %462 = vector.broadcast %7 : vector<1x128xf32> to vector<8x128xf32>
    %463 = arith.addf %461, %462 : vector<8x128xf32>
    %464 = vector.extract_strided_slice %463 {offsets = [0, 0], sizes = [8, 32], strides = [1, 1]} : vector<8x128xf32> to vector<8x32xf32>
    %465 = arith.negf %464 : vector<8x32xf32>
    %466 = math.exp %465 : vector<8x32xf32>
    %cst_95 = arith.constant 1.000000e+00 : f32
    %467 = vector.broadcast %cst_95 : f32 to vector<8x32xf32>
    %468 = arith.addf %467, %466 : vector<8x32xf32>
    %469 = arith.divf %467, %468 : vector<8x32xf32>
    %470 = vector.extract_strided_slice %463 {offsets = [0, 32], sizes = [8, 32], strides = [1, 1]} : vector<8x128xf32> to vector<8x32xf32>
    %471 = arith.negf %470 : vector<8x32xf32>
    %472 = math.exp %471 : vector<8x32xf32>
    %cst_96 = arith.constant 1.000000e+00 : f32
    %473 = vector.broadcast %cst_96 : f32 to vector<8x32xf32>
    %474 = arith.addf %473, %472 : vector<8x32xf32>
    %475 = arith.divf %473, %474 : vector<8x32xf32>
    %476 = vector.extract_strided_slice %463 {offsets = [0, 64], sizes = [8, 32], strides = [1, 1]} : vector<8x128xf32> to vector<8x32xf32>
    %477 = math.tanh %476 : vector<8x32xf32>
    %478 = vector.extract_strided_slice %463 {offsets = [0, 96], sizes = [8, 32], strides = [1, 1]} : vector<8x128xf32> to vector<8x32xf32>
    %479 = arith.negf %478 : vector<8x32xf32>
    %480 = math.exp %479 : vector<8x32xf32>
    %cst_97 = arith.constant 1.000000e+00 : f32
    %481 = vector.broadcast %cst_97 : f32 to vector<8x32xf32>
    %482 = arith.addf %481, %480 : vector<8x32xf32>
    %483 = arith.divf %481, %482 : vector<8x32xf32>
    %484 = arith.mulf %475, %426 : vector<8x32xf32>
    %485 = arith.mulf %469, %477 : vector<8x32xf32>
    %486 = arith.addf %484, %485 : vector<8x32xf32>
    %487 = math.tanh %486 : vector<8x32xf32>
    %488 = arith.mulf %483, %487 : vector<8x32xf32>
    %c8_i32 = arith.constant 8 : i32
    %c0_98 = arith.constant 0 : index
    %c0_99 = arith.constant 0 : index
    %489 = vector.load %arg4[%c0_98, %c0_99] : memref<32x1xf32, #tpu.memory_space<vmem>>, vector<32x1xf32>
    %cst_100 = arith.constant dense<0.000000e+00> : vector<8x1xf32>
    %490 = tpu.matmul %488, %489, %cst_100 {dimension_numbers = #tpu.dot_dimension_numbers<[1], [0], [0], [1], [0, 0, 1, 1], [], []>} : vector<8x32xf32>, vector<32x1xf32>, vector<8x1xf32> -> vector<8x1xf32>
    %c0_101 = arith.constant 0 : index
    %c0_102 = arith.constant 0 : index
    %491 = vector.load %arg5[%c0_101, %c0_102] : memref<1x1xf32, #tpu.memory_space<vmem>>, vector<1x1xf32>
    %492 = vector.broadcast %491 : vector<1x1xf32> to vector<8x1xf32>
    %493 = arith.addf %490, %492 : vector<8x1xf32>
    %c0_103 = arith.constant 0 : index
    %c0_104 = arith.constant 0 : index
    %494 = vector.load %arg6[%c0_103, %c0_104] : memref<8x1xf32, #tpu.memory_space<vmem>>, vector<8x1xf32>
    tpu.vector_store %arg6[%c0_103, %c0_104], %493 {strides = array<i32>} : memref<8x1xf32, #tpu.memory_space<vmem>>, vector<8x1xf32>,
    return
  }
}

</mosaic_0001>

<llo_original>
// kernel: lstm_forward.1
$region0: #{lstm_forward.1}
  #allocation0 [shape = 'u32[]', space=smem, size = 0x4, offset = 0x4, fixed_abs, tag = 'smem constant byte address 0x4 - core index']
  #allocation1 [shape = 'u32[144,128]{1,0:T(1,128)}', space=vmem, size = 0x12000, scoped, tag = 'internal scratch']
  #allocation2 [shape = 'f32[1,1]{1,0:T(1,128)S(1)}', space=vmem, size = 0x200, scoped, tag = 'scoped memory for lstm_forward.1']
  %s0 = inlined_call_operand.vmem [shape: f32[8,8,128], index: 0, kind: input, shape index: {}]
  %s1 = inlined_call_operand.vmem [shape: f32[2,32,128], index: 1, kind: input, shape index: {}]
  %s2 = inlined_call_operand.vmem [shape: f32[1,32,128], index: 2, kind: input, shape index: {}]
  %s3 = inlined_call_operand.vmem [shape: f32[1,1,128], index: 3, kind: input, shape index: {}]
  %s4 = inlined_call_operand.vmem [shape: f32[32,1], index: 4, kind: input, shape index: {}]
  %s5 = inlined_call_operand.<no memory space> [shape: f32[1,1], index: 5, kind: input, shape index: {}]
  %s6 = inlined_call_operand.vmem [shape: f32[8,1], index: 6, kind: output, shape index: {}]
  %s7 = sld [smem:[#allocation0]]
  $region34: #{lstm_forward.1} parent=0
    _
  %s9 = ssub.s32 1, %s7
  %s10 = scalar_select 0, %s9, %s7
  %v11 = vstv %s5
  %12 = vst [vmem:[#allocation2] sm:$0x1] %v11
  // Predicated region
  $region2: #{lstm_forward.1} parent=0 // pred_check
    _
  $region3: #{lstm_forward.1} parent=0 // pred_check_branch
    %14 = sbr.rel (0) target = $region5
  $region4: #{lstm_forward.1} parent=0 // pred_region
    _
  $region5: #{lstm_forward.1} parent=0 // pred_fallthru
    _
  // Predicated region
  $region6: #{lstm_forward.1} parent=0 // pred_check
    _
  $region7: #{lstm_forward.1} parent=0 // pred_check_branch
    %16 = sbr.rel (0) target = $region9
  $region8: #{lstm_forward.1} parent=0 // pred_region
    _
  $region9: #{lstm_forward.1} parent=0 // pred_fallthru
    _
  // Predicated region
  $region10: #{lstm_forward.1} parent=0 // pred_check
    _
  $region11: #{lstm_forward.1} parent=0 // pred_check_branch
    %18 = sbr.rel (0) target = $region13
  $region12: #{lstm_forward.1} parent=0 // pred_region
    _
  $region13: #{lstm_forward.1} parent=0 // pred_fallthru
    _
  // Predicated region
  $region14: #{lstm_forward.1} parent=0 // pred_check
    _
  $region15: #{lstm_forward.1} parent=0 // pred_check_branch
    %20 = sbr.rel (0) target = $region17
  $region16: #{lstm_forward.1} parent=0 // pred_region
    _
  $region17: #{lstm_forward.1} parent=0 // pred_fallthru
    _
  // Predicated region
  $region18: #{lstm_forward.1} parent=0 // pred_check
    _
  $region19: #{lstm_forward.1} parent=0 // pred_check_branch
    %22 = sbr.rel (0) target = $region21
  $region20: #{lstm_forward.1} parent=0 // pred_region
    _
  $region21: #{lstm_forward.1} parent=0 // pred_fallthru
    _
  // Predicated region
  $region22: #{lstm_forward.1} parent=0 // pred_check
    _
  $region23: #{lstm_forward.1} parent=0 // pred_check_branch
    %24 = sbr.rel (0) target = $region25
  $region24: #{lstm_forward.1} parent=0 // pred_region
    _
  $region25: #{lstm_forward.1} parent=0 // pred_fallthru
    _
  %v25 = vld [vmem:[%s1] sm:$0xff]
  %v26 = vld [vmem:[%s1 + $0x8] sm:$0xff]
  %v27 = vld [vmem:[%s1 + $0x10] sm:$0xff]
  %v28 = vld [vmem:[%s1 + $0x18] sm:$0xff]
  %s29 = scalar_lea.vmem %s1, 32
  %v30 = vld [vmem:[%s29] sm:$0xff]
  %v31 = vld [vmem:[%s29 + $0x8] sm:$0xff]
  %v32 = vld [vmem:[%s29 + $0x10] sm:$0xff]
  %v33 = vld [vmem:[%s29 + $0x18] sm:$0xff]
  %v34 = vld [vmem:[%s2] sm:$0xff]
  %v35 = vld [vmem:[%s2 + $0x8] sm:$0xff]
  %v36 = vld [vmem:[%s2 + $0x10] sm:$0xff]
  %v37 = vld [vmem:[%s2 + $0x18] sm:$0xff]
  %v38 = vld [vmem:[%s3] sm:$0x1]
  %v39 = vld [vmem:[%s0] sm:$0xff]
  %vm40 = vcmask 261120
  %v42 = vsel %vm40, 0.0, 0
  %44 = vmatprep.subr.mxu0 0.0
  %45 = vmatpush1.msra.mxu0 0.0
  %46 = vmatprep.subr.mxu0 0.0
  %47 = vmatpush1.msra.mxu0 0.0
  %48 = vmatprep.subr.mxu0 0.0
  %49 = vmatpush1.msra.mxu0 0.0
  %50 = vmatprep.subr.mxu0 0.0
  %51 = vmatpush1.msra.mxu0 0.0
  %52 = vmatprep.subr.mxu0 0.0
  %53 = vmatpush1.msra.mxu0 0.0
  %54 = vmatprep.subr.mxu0 0.0
  %55 = vmatpush1.msra.mxu0 0.0
  %56 = vmatprep.subr.mxu0 0.0
  %57 = vmatpush1.msra.mxu0 0.0
  %58 = vmatprep.subr.mxu0 0.0
  %59 = vmatpush1.msra.mxu0 0.0
  %60 = vmatprep.subr.mxu0 0.0
  %61 = vmatpush1.msra.mxu0 0.0
  %62 = vmatprep.subr.mxu0 0.0
  %63 = vmatpush1.msra.mxu0 0.0
  %64 = vmatprep.subr.mxu0 0.0
  %65 = vmatpush1.msra.mxu0 0.0
  %66 = vmatprep.subr.mxu0 0.0
  %67 = vmatpush1.msra.mxu0 0.0
  %68 = vmatprep.subr.mxu0 0.0
  %69 = vmatpush1.msra.mxu0 %v28
  %70 = vmatprep.subr.mxu0 0.0
  %71 = vmatpush1.msra.mxu0 %v27
  %72 = vmatprep.subr.mxu0 0.0
  %73 = vmatpush1.msra.mxu0 %v26
  %74 = vmatprep.subr.mxu0 0.0
  %75 = vmatpush1.msra.mxu0 %v25
  %76 = vmatprep.subr.mxu0 0.0
  %77 = vmatpush2.msra.mxu0 0.0
  %78 = vmatprep.subr.mxu0 0.0
  %79 = vmatpush2.msra.mxu0 0.0
  %80 = vmatprep.subr.mxu0 0.0
  %81 = vmatpush2.msra.mxu0 0.0
  %82 = vmatprep.subr.mxu0 0.0
  %83 = vmatpush2.msra.mxu0 0.0
  %84 = vmatprep.subr.mxu0 0.0
  %85 = vmatpush2.msra.mxu0 0.0
  %86 = vmatprep.subr.mxu0 0.0
  %87 = vmatpush2.msra.mxu0 0.0
  %88 = vmatprep.subr.mxu0 0.0
  %89 = vmatpush2.msra.mxu0 0.0
  %90 = vmatprep.subr.mxu0 0.0
  %91 = vmatpush2.msra.mxu0 0.0
  %92 = vmatprep.subr.mxu0 0.0
  %93 = vmatpush2.msra.mxu0 0.0
  %94 = vmatprep.subr.mxu0 0.0
  %95 = vmatpush2.msra.mxu0 0.0
  %96 = vmatprep.subr.mxu0 0.0
  %97 = vmatpush2.msra.mxu0 0.0
  %98 = vmatprep.subr.mxu0 0.0
  %99 = vmatpush2.msra.mxu0 0.0
  %100 = vmatprep.subr.mxu0 0.0
  %101 = vmatpush2.msra.mxu0 0.0
  %102 = vmatprep.subr.mxu0 0.0
  %103 = vmatpush2.msra.mxu0 0.0
  %104 = vmatprep.subr.mxu0 0.0
  %105 = vmatpush2.msra.mxu0 0.0
  %106 = vmatprep.subr.mxu0 0.0
  %107 = vmatpush2.msra.mxu0 0.0
  %108 = vmatprep.mubr.f32.mxu0 0.0
  %109 = vmatmul.mubr.f32.gmra.mxu0 %v42
  %v110 = vpop.f32.mrf.mxu0
  %v111 = vadd.f32 0.0, %v110
  %v112 = vpop.f32.mrf.mxu0
  %113 = vdwg.mxu0
  %v114 = vadd.f32 %v39, %v111
  %v115 = vxor.u32 %v114, 2147483648
  %v116 = vmul.f32 %v115, 1.442695
  %v117 = vpow.pop %v116
  %v118 = vadd.f32 %v117, 1.0
  %v119 = vrcp.pop %v118
  %v120 = vmul.f32 1.0, %v119
  %v121 = vtanh.pop %v114
  %v122 = vmul.f32 %v120, 0.0
  %124 = vrot.lane.b32.xlu0 %v121, 64
  %v125 = vpop.permute.xlu0 %124
  %v127 = vmul.f32 %v120, %v125
  %129 = vrot.lane.b32.xlu0 %v127, 32
  %v130 = vpop.permute.xlu0 %129
  %v132 = vadd.f32 %v122, %v130
  %v133 = vtanh.pop %v132
  %135 = vrot.lane.b32.xlu0 %v133, 64
  %v136 = vpop.permute.xlu0 %135
  %v138 = vmul.f32 %v120, %v136
  %139 = vmatprep.subr.mxu0 0.0
  %140 = vmatpush1.msra.mxu0 0.0
  %141 = vmatprep.subr.mxu0 0.0
  %142 = vmatpush1.msra.mxu0 0.0
  %143 = vmatprep.subr.mxu0 0.0
  %144 = vmatpush1.msra.mxu0 0.0
  %145 = vmatprep.subr.mxu0 0.0
  %146 = vmatpush1.msra.mxu0 0.0
  %147 = vmatprep.subr.mxu0 0.0
  %148 = vmatpush1.msra.mxu0 0.0
  %149 = vmatprep.subr.mxu0 0.0
  %150 = vmatpush1.msra.mxu0 0.0
  %151 = vmatprep.subr.mxu0 0.0
  %152 = vmatpush1.msra.mxu0 0.0
  %153 = vmatprep.subr.mxu0 0.0
  %154 = vmatpush1.msra.mxu0 0.0
  %155 = vmatprep.subr.mxu0 0.0
  %156 = vmatpush1.msra.mxu0 0.0
  %157 = vmatprep.subr.mxu0 0.0
  %158 = vmatpush1.msra.mxu0 0.0
  %159 = vmatprep.subr.mxu0 0.0
  %160 = vmatpush1.msra.mxu0 0.0
  %161 = vmatprep.subr.mxu0 0.0
  %162 = vmatpush1.msra.mxu0 0.0
  %163 = vmatprep.subr.mxu0 0.0
  %164 = vmatpush1.msra.mxu0 %v33
  %165 = vmatprep.subr.mxu0 0.0
  %166 = vmatpush1.msra.mxu0 %v32
  %167 = vmatprep.subr.mxu0 0.0
  %168 = vmatpush1.msra.mxu0 %v31
  %169 = vmatprep.subr.mxu0 0.0
  %170 = vmatpush1.msra.mxu0 %v30
  %171 = vmatprep.subr.mxu0 0.0
  %172 = vmatpush2.msra.mxu0 0.0
  %173 = vmatprep.subr.mxu0 0.0
  %174 = vmatpush2.msra.mxu0 0.0
  %175 = vmatprep.subr.mxu0 0.0
  %176 = vmatpush2.msra.mxu0 0.0
  %177 = vmatprep.subr.mxu0 0.0
  %178 = vmatpush2.msra.mxu0 0.0
  %179 = vmatprep.subr.mxu0 0.0
  %180 = vmatpush2.msra.mxu0 0.0
  %181 = vmatprep.subr.mxu0 0.0
  %182 = vmatpush2.msra.mxu0 0.0
  %183 = vmatprep.subr.mxu0 0.0
  %184 = vmatpush2.msra.mxu0 0.0
  %185 = vmatprep.subr.mxu0 0.0
  %186 = vmatpush2.msra.mxu0 0.0
  %187 = vmatprep.subr.mxu0 0.0
  %188 = vmatpush2.msra.mxu0 0.0
  %189 = vmatprep.subr.mxu0 0.0
  %190 = vmatpush2.msra.mxu0 0.0
  %191 = vmatprep.subr.mxu0 0.0
  %192 = vmatpush2.msra.mxu0 0.0
  %193 = vmatprep.subr.mxu0 0.0
  %194 = vmatpush2.msra.mxu0 0.0
  %195 = vmatprep.subr.mxu0 0.0
  %196 = vmatpush2.msra.mxu0 0.0
  %197 = vmatprep.subr.mxu0 0.0
  %198 = vmatpush2.msra.mxu0 0.0
  %199 = vmatprep.subr.mxu0 0.0
  %200 = vmatpush2.msra.mxu0 0.0
  %201 = vmatprep.subr.mxu0 0.0
  %202 = vmatpush2.msra.mxu0 0.0
  %203 = vmatprep.mubr.f32.mxu0 0.0
  %204 = vmatmul.mubr.f32.gmra.mxu0 %v42
  %v205 = vpop.f32.mrf.mxu0
  %v206 = vadd.f32 0.0, %v205
  %v207 = vpop.f32.mrf.mxu0
  %208 = vdwg.mxu0
  %210 = vrot.lane.b32.xlu0 %v138, 32
  %v211 = vpop.permute.xlu0 %210
  %v212 = vsel %vm40, %v211, 0
  %214 = vmatprep.subr.mxu0 0.0
  %215 = vmatpush1.msra.mxu0 0.0
  %216 = vmatprep.subr.mxu0 0.0
  %217 = vmatpush1.msra.mxu0 0.0
  %218 = vmatprep.subr.mxu0 0.0
  %219 = vmatpush1.msra.mxu0 0.0
  %220 = vmatprep.subr.mxu0 0.0
  %221 = vmatpush1.msra.mxu0 0.0
  %222 = vmatprep.subr.mxu0 0.0
  %223 = vmatpush1.msra.mxu0 0.0
  %224 = vmatprep.subr.mxu0 0.0
  %225 = vmatpush1.msra.mxu0 0.0
  %226 = vmatprep.subr.mxu0 0.0
  %227 = vmatpush1.msra.mxu0 0.0
  %228 = vmatprep.subr.mxu0 0.0
  %229 = vmatpush1.msra.mxu0 0.0
  %230 = vmatprep.subr.mxu0 0.0
  %231 = vmatpush1.msra.mxu0 0.0
  %232 = vmatprep.subr.mxu0 0.0
  %233 = vmatpush1.msra.mxu0 0.0
  %234 = vmatprep.subr.mxu0 0.0
  %235 = vmatpush1.msra.mxu0 0.0
  %236 = vmatprep.subr.mxu0 0.0
  %237 = vmatpush1.msra.mxu0 0.0
  %238 = vmatprep.subr.mxu0 0.0
  %239 = vmatpush1.msra.mxu0 %v37
  %240 = vmatprep.subr.mxu0 0.0
  %241 = vmatpush1.msra.mxu0 %v36
  %242 = vmatprep.subr.mxu0 0.0
  %243 = vmatpush1.msra.mxu0 %v35
  %244 = vmatprep.subr.mxu0 0.0
  %245 = vmatpush1.msra.mxu0 %v34
  %246 = vmatprep.subr.mxu0 0.0
  %247 = vmatpush2.msra.mxu0 0.0
  %248 = vmatprep.subr.mxu0 0.0
  %249 = vmatpush2.msra.mxu0 0.0
  %250 = vmatprep.subr.mxu0 0.0
  %251 = vmatpush2.msra.mxu0 0.0
  %252 = vmatprep.subr.mxu0 0.0
  %253 = vmatpush2.msra.mxu0 0.0
  %254 = vmatprep.subr.mxu0 0.0
  %255 = vmatpush2.msra.mxu0 0.0
  %256 = vmatprep.subr.mxu0 0.0
  %257 = vmatpush2.msra.mxu0 0.0
  %258 = vmatprep.subr.mxu0 0.0
  %259 = vmatpush2.msra.mxu0 0.0
  %260 = vmatprep.subr.mxu0 0.0
  %261 = vmatpush2.msra.mxu0 0.0
  %262 = vmatprep.subr.mxu0 0.0
  %263 = vmatpush2.msra.mxu0 0.0
  %264 = vmatprep.subr.mxu0 0.0
  %265 = vmatpush2.msra.mxu0 0.0
  %266 = vmatprep.subr.mxu0 0.0
  %267 = vmatpush2.msra.mxu0 0.0
  %268 = vmatprep.subr.mxu0 0.0
  %269 = vmatpush2.msra.mxu0 0.0
  %270 = vmatprep.subr.mxu0 0.0
  %271 = vmatpush2.msra.mxu0 0.0
  %272 = vmatprep.subr.mxu0 0.0
  %273 = vmatpush2.msra.mxu0 0.0
  %274 = vmatprep.subr.mxu0 0.0
  %275 = vmatpush2.msra.mxu0 0.0
  %276 = vmatprep.subr.mxu0 0.0
  %277 = vmatpush2.msra.mxu0 0.0
  %278 = vmatprep.mubr.f32.mxu0 0.0
  %279 = vmatmul.mubr.f32.gmra.mxu0 %v212
  %v280 = vpop.f32.mrf.mxu0
  %v281 = vadd.f32 %v206, %v280
  %v282 = vpop.f32.mrf.mxu0
  %283 = vdwg.mxu0
  %v285 = vlaneseq
  %v286 = vshrl.u32 %v285, 7
  %v287 = vsub.s32 0, %v286
  %v288 = vrot.slane %v38, %v287
  %v290 = vadd.f32 %v281, %v288
  %v291 = vxor.u32 %v290, 2147483648
  %v292 = vmul.f32 %v291, 1.442695
  %v293 = vpow.pop %v292
  %v294 = vadd.f32 %v293, 1.0
  %v295 = vrcp.pop %v294
  %v296 = vmul.f32 1.0, %v295
  %v297 = vtanh.pop %v290
  %v298 = vmul.f32 %v296, 0.0
  %300 = vrot.lane.b32.xlu0 %v297, 64
  %v301 = vpop.permute.xlu0 %300
  %v303 = vmul.f32 %v296, %v301
  %305 = vrot.lane.b32.xlu0 %v303, 32
  %v306 = vpop.permute.xlu0 %305
  %v308 = vadd.f32 %v298, %v306
  %v309 = vtanh.pop %v308
  %311 = vrot.lane.b32.xlu0 %v309, 64
  %v312 = vpop.permute.xlu0 %311
  %v314 = vmul.f32 %v296, %v312
  %s315 = scalar_lea.vmem %s0, 8
  %v316 = vld [vmem:[%s315] sm:$0xff]
  %317 = vmatprep.subr.mxu0 0.0
  %318 = vmatpush1.msra.mxu0 0.0
  %319 = vmatprep.subr.mxu0 0.0
  %320 = vmatpush1.msra.mxu0 0.0
  %321 = vmatprep.subr.mxu0 0.0
  %322 = vmatpush1.msra.mxu0 0.0
  %323 = vmatprep.subr.mxu0 0.0
  %324 = vmatpush1.msra.mxu0 0.0
  %325 = vmatprep.subr.mxu0 0.0
  %326 = vmatpush1.msra.mxu0 0.0
  %327 = vmatprep.subr.mxu0 0.0
  %328 = vmatpush1.msra.mxu0 0.0
  %329 = vmatprep.subr.mxu0 0.0
  %330 = vmatpush1.msra.mxu0 0.0
  %331 = vmatprep.subr.mxu0 0.0
  %332 = vmatpush1.msra.mxu0 0.0
  %333 = vmatprep.subr.mxu0 0.0
  %334 = vmatpush1.msra.mxu0 0.0
  %335 = vmatprep.subr.mxu0 0.0
  %336 = vmatpush1.msra.mxu0 0.0
  %337 = vmatprep.subr.mxu0 0.0
  %338 = vmatpush1.msra.mxu0 0.0
  %339 = vmatprep.subr.mxu0 0.0
  %340 = vmatpush1.msra.mxu0 0.0
  %341 = vmatprep.subr.mxu0 0.0
  %342 = vmatpush1.msra.mxu0 %v28
  %343 = vmatprep.subr.mxu0 0.0
  %344 = vmatpush1.msra.mxu0 %v27
  %345 = vmatprep.subr.mxu0 0.0
  %346 = vmatpush1.msra.mxu0 %v26
  %347 = vmatprep.subr.mxu0 0.0
  %348 = vmatpush1.msra.mxu0 %v25
  %349 = vmatprep.subr.mxu0 0.0
  %350 = vmatpush2.msra.mxu0 0.0
  %351 = vmatprep.subr.mxu0 0.0
  %352 = vmatpush2.msra.mxu0 0.0
  %353 = vmatprep.subr.mxu0 0.0
  %354 = vmatpush2.msra.mxu0 0.0
  %355 = vmatprep.subr.mxu0 0.0
  %356 = vmatpush2.msra.mxu0 0.0
  %357 = vmatprep.subr.mxu0 0.0
  %358 = vmatpush2.msra.mxu0 0.0
  %359 = vmatprep.subr.mxu0 0.0
  %360 = vmatpush2.msra.mxu0 0.0
  %361 = vmatprep.subr.mxu0 0.0
  %362 = vmatpush2.msra.mxu0 0.0
  %363 = vmatprep.subr.mxu0 0.0
  %364 = vmatpush2.msra.mxu0 0.0
  %365 = vmatprep.subr.mxu0 0.0
  %366 = vmatpush2.msra.mxu0 0.0
  %367 = vmatprep.subr.mxu0 0.0
  %368 = vmatpush2.msra.mxu0 0.0
  %369 = vmatprep.subr.mxu0 0.0
  %370 = vmatpush2.msra.mxu0 0.0
  %371 = vmatprep.subr.mxu0 0.0
  %372 = vmatpush2.msra.mxu0 0.0
  %373 = vmatprep.subr.mxu0 0.0
  %374 = vmatpush2.msra.mxu0 0.0
  %375 = vmatprep.subr.mxu0 0.0
  %376 = vmatpush2.msra.mxu0 0.0
  %377 = vmatprep.subr.mxu0 0.0
  %378 = vmatpush2.msra.mxu0 0.0
  %379 = vmatprep.subr.mxu0 0.0
  %380 = vmatpush2.msra.mxu0 0.0
  %381 = vmatprep.mubr.f32.mxu0 0.0
  %382 = vmatmul.mubr.f32.gmra.mxu0 %v212
  %v383 = vpop.f32.mrf.mxu0
  %v384 = vadd.f32 0.0, %v383
  %v385 = vpop.f32.mrf.mxu0
  %386 = vdwg.mxu0
  %v387 = vadd.f32 %v316, %v384
  %v388 = vxor.u32 %v387, 2147483648
  %v389 = vmul.f32 %v388, 1.442695
  %v390 = vpow.pop %v389
  %v391 = vadd.f32 %v390, 1.0
  %v392 = vrcp.pop %v391
  %v393 = vmul.f32 1.0, %v392
  %v394 = vtanh.pop %v387
  %v395 = vmul.f32 %v393, %v132
  %397 = vrot.lane.b32.xlu0 %v394, 64
  %v398 = vpop.permute.xlu0 %397
  %v400 = vmul.f32 %v393, %v398
  %402 = vrot.lane.b32.xlu0 %v400, 32
  %v403 = vpop.permute.xlu0 %402
  %v405 = vadd.f32 %v395, %v403
  %v406 = vtanh.pop %v405
  %408 = vrot.lane.b32.xlu0 %v406, 64
  %v409 = vpop.permute.xlu0 %408
  %v411 = vmul.f32 %v393, %v409
  %413 = vrot.lane.b32.xlu0 %v314, 32
  %v414 = vpop.permute.xlu0 %413
  %v415 = vsel %vm40, %v414, 0
  %417 = vmatprep.subr.mxu0 0.0
  %418 = vmatpush1.msra.mxu0 0.0
  %419 = vmatprep.subr.mxu0 0.0
  %420 = vmatpush1.msra.mxu0 0.0
  %421 = vmatprep.subr.mxu0 0.0
  %422 = vmatpush1.msra.mxu0 0.0
  %423 = vmatprep.subr.mxu0 0.0
  %424 = vmatpush1.msra.mxu0 0.0
  %425 = vmatprep.subr.mxu0 0.0
  %426 = vmatpush1.msra.mxu0 0.0
  %427 = vmatprep.subr.mxu0 0.0
  %428 = vmatpush1.msra.mxu0 0.0
  %429 = vmatprep.subr.mxu0 0.0
  %430 = vmatpush1.msra.mxu0 0.0
  %431 = vmatprep.subr.mxu0 0.0
  %432 = vmatpush1.msra.mxu0 0.0
  %433 = vmatprep.subr.mxu0 0.0
  %434 = vmatpush1.msra.mxu0 0.0
  %435 = vmatprep.subr.mxu0 0.0
  %436 = vmatpush1.msra.mxu0 0.0
  %437 = vmatprep.subr.mxu0 0.0
  %438 = vmatpush1.msra.mxu0 0.0
  %439 = vmatprep.subr.mxu0 0.0
  %440 = vmatpush1.msra.mxu0 0.0
  %441 = vmatprep.subr.mxu0 0.0
  %442 = vmatpush1.msra.mxu0 %v33
  %443 = vmatprep.subr.mxu0 0.0
  %444 = vmatpush1.msra.mxu0 %v32
  %445 = vmatprep.subr.mxu0 0.0
  %446 = vmatpush1.msra.mxu0 %v31
  %447 = vmatprep.subr.mxu0 0.0
  %448 = vmatpush1.msra.mxu0 %v30
  %449 = vmatprep.subr.mxu0 0.0
  %450 = vmatpush2.msra.mxu0 0.0
  %451 = vmatprep.subr.mxu0 0.0
  %452 = vmatpush2.msra.mxu0 0.0
  %453 = vmatprep.subr.mxu0 0.0
  %454 = vmatpush2.msra.mxu0 0.0
  %455 = vmatprep.subr.mxu0 0.0
  %456 = vmatpush2.msra.mxu0 0.0
  %457 = vmatprep.subr.mxu0 0.0
  %458 = vmatpush2.msra.mxu0 0.0
  %459 = vmatprep.subr.mxu0 0.0
  %460 = vmatpush2.msra.mxu0 0.0
  %461 = vmatprep.subr.mxu0 0.0
  %462 = vmatpush2.msra.mxu0 0.0
  %463 = vmatprep.subr.mxu0 0.0
  %464 = vmatpush2.msra.mxu0 0.0
  %465 = vmatprep.subr.mxu0 0.0
  %466 = vmatpush2.msra.mxu0 0.0
  %467 = vmatprep.subr.mxu0 0.0
  %468 = vmatpush2.msra.mxu0 0.0
  %469 = vmatprep.subr.mxu0 0.0
  %470 = vmatpush2.msra.mxu0 0.0
  %471 = vmatprep.subr.mxu0 0.0
  %472 = vmatpush2.msra.mxu0 0.0
  %473 = vmatprep.subr.mxu0 0.0
  %474 = vmatpush2.msra.mxu0 0.0
  %475 = vmatprep.subr.mxu0 0.0
  %476 = vmatpush2.msra.mxu0 0.0
  %477 = vmatprep.subr.mxu0 0.0
  %478 = vmatpush2.msra.mxu0 0.0
  %479 = vmatprep.subr.mxu0 0.0
  %480 = vmatpush2.msra.mxu0 0.0
  %481 = vmatprep.mubr.f32.mxu0 0.0
  %482 = vmatmul.mubr.f32.gmra.mxu0 %v415
  %v483 = vpop.f32.mrf.mxu0
  %v484 = vadd.f32 0.0, %v483
  %v485 = vpop.f32.mrf.mxu0
  %486 = vdwg.mxu0
  %488 = vrot.lane.b32.xlu0 %v411, 32
  %v489 = vpop.permute.xlu0 %488
  %v490 = vsel %vm40, %v489, 0
  %492 = vmatprep.subr.mxu0 0.0
  %493 = vmatpush1.msra.mxu0 0.0
  %494 = vmatprep.subr.mxu0 0.0
  %495 = vmatpush1.msra.mxu0 0.0
  %496 = vmatprep.subr.mxu0 0.0
  %497 = vmatpush1.msra.mxu0 0.0
  %498 = vmatprep.subr.mxu0 0.0
  %499 = vmatpush1.msra.mxu0 0.0
  %500 = vmatprep.subr.mxu0 0.0
  %501 = vmatpush1.msra.mxu0 0.0
  %502 = vmatprep.subr.mxu0 0.0
  %503 = vmatpush1.msra.mxu0 0.0
  %504 = vmatprep.subr.mxu0 0.0
  %505 = vmatpush1.msra.mxu0 0.0
  %506 = vmatprep.subr.mxu0 0.0
  %507 = vmatpush1.msra.mxu0 0.0
  %508 = vmatprep.subr.mxu0 0.0
  %509 = vmatpush1.msra.mxu0 0.0
  %510 = vmatprep.subr.mxu0 0.0
  %511 = vmatpush1.msra.mxu0 0.0
  %512 = vmatprep.subr.mxu0 0.0
  %513 = vmatpush1.msra.mxu0 0.0
  %514 = vmatprep.subr.mxu0 0.0
  %515 = vmatpush1.msra.mxu0 0.0
  %516 = vmatprep.subr.mxu0 0.0
  %517 = vmatpush1.msra.mxu0 %v37
  %518 = vmatprep.subr.mxu0 0.0
  %519 = vmatpush1.msra.mxu0 %v36
  %520 = vmatprep.subr.mxu0 0.0
  %521 = vmatpush1.msra.mxu0 %v35
  %522 = vmatprep.subr.mxu0 0.0
  %523 = vmatpush1.msra.mxu0 %v34
  %524 = vmatprep.subr.mxu0 0.0
  %525 = vmatpush2.msra.mxu0 0.0
  %526 = vmatprep.subr.mxu0 0.0
  %527 = vmatpush2.msra.mxu0 0.0
  %528 = vmatprep.subr.mxu0 0.0
  %529 = vmatpush2.msra.mxu0 0.0
  %530 = vmatprep.subr.mxu0 0.0
  %531 = vmatpush2.msra.mxu0 0.0
  %532 = vmatprep.subr.mxu0 0.0
  %533 = vmatpush2.msra.mxu0 0.0
  %534 = vmatprep.subr.mxu0 0.0
  %535 = vmatpush2.msra.mxu0 0.0
  %536 = vmatprep.subr.mxu0 0.0
  %537 = vmatpush2.msra.mxu0 0.0
  %538 = vmatprep.subr.mxu0 0.0
  %539 = vmatpush2.msra.mxu0 0.0
  %540 = vmatprep.subr.mxu0 0.0
  %541 = vmatpush2.msra.mxu0 0.0
  %542 = vmatprep.subr.mxu0 0.0
  %543 = vmatpush2.msra.mxu0 0.0
  %544 = vmatprep.subr.mxu0 0.0
  %545 = vmatpush2.msra.mxu0 0.0
  %546 = vmatprep.subr.mxu0 0.0
  %547 = vmatpush2.msra.mxu0 0.0
  %548 = vmatprep.subr.mxu0 0.0
  %549 = vmatpush2.msra.mxu0 0.0
  %550 = vmatprep.subr.mxu0 0.0
  %551 = vmatpush2.msra.mxu0 0.0
  %552 = vmatprep.subr.mxu0 0.0
  %553 = vmatpush2.msra.mxu0 0.0
  %554 = vmatprep.subr.mxu0 0.0
  %555 = vmatpush2.msra.mxu0 0.0
  %556 = vmatprep.mubr.f32.mxu0 0.0
  %557 = vmatmul.mubr.f32.gmra.mxu0 %v490
  %v558 = vpop.f32.mrf.mxu0
  %v559 = vadd.f32 %v484, %v558
  %v560 = vpop.f32.mrf.mxu0
  %561 = vdwg.mxu0
  %v562 = vadd.f32 %v559, %v288
  %v563 = vxor.u32 %v562, 2147483648
  %v564 = vmul.f32 %v563, 1.442695
  %v565 = vpow.pop %v564
  %v566 = vadd.f32 %v565, 1.0
  %v567 = vrcp.pop %v566
  %v568 = vmul.f32 1.0, %v567
  %v569 = vtanh.pop %v562
  %v570 = vmul.f32 %v568, %v308
  %572 = vrot.lane.b32.xlu0 %v569, 64
  %v573 = vpop.permute.xlu0 %572
  %v575 = vmul.f32 %v568, %v573
  %577 = vrot.lane.b32.xlu0 %v575, 32
  %v578 = vpop.permute.xlu0 %577
  %v580 = vadd.f32 %v570, %v578
  %v581 = vtanh.pop %v580
  %583 = vrot.lane.b32.xlu0 %v581, 64
  %v584 = vpop.permute.xlu0 %583
  %v586 = vmul.f32 %v568, %v584
  %s587 = scalar_lea.vmem %s0, 16
  %v588 = vld [vmem:[%s587] sm:$0xff]
  %589 = vmatprep.subr.mxu0 0.0
  %590 = vmatpush1.msra.mxu0 0.0
  %591 = vmatprep.subr.mxu0 0.0
  %592 = vmatpush1.msra.mxu0 0.0
  %593 = vmatprep.subr.mxu0 0.0
  %594 = vmatpush1.msra.mxu0 0.0
  %595 = vmatprep.subr.mxu0 0.0
  %596 = vmatpush1.msra.mxu0 0.0
  %597 = vmatprep.subr.mxu0 0.0
  %598 = vmatpush1.msra.mxu0 0.0
  %599 = vmatprep.subr.mxu0 0.0
  %600 = vmatpush1.msra.mxu0 0.0
  %601 = vmatprep.subr.mxu0 0.0
  %602 = vmatpush1.msra.mxu0 0.0
  %603 = vmatprep.subr.mxu0 0.0
  %604 = vmatpush1.msra.mxu0 0.0
  %605 = vmatprep.subr.mxu0 0.0
  %606 = vmatpush1.msra.mxu0 0.0
  %607 = vmatprep.subr.mxu0 0.0
  %608 = vmatpush1.msra.mxu0 0.0
  %609 = vmatprep.subr.mxu0 0.0
  %610 = vmatpush1.msra.mxu0 0.0
  %611 = vmatprep.subr.mxu0 0.0
  %612 = vmatpush1.msra.mxu0 0.0
  %613 = vmatprep.subr.mxu0 0.0
  %614 = vmatpush1.msra.mxu0 %v28
  %615 = vmatprep.subr.mxu0 0.0
  %616 = vmatpush1.msra.mxu0 %v27
  %617 = vmatprep.subr.mxu0 0.0
  %618 = vmatpush1.msra.mxu0 %v26
  %619 = vmatprep.subr.mxu0 0.0
  %620 = vmatpush1.msra.mxu0 %v25
  %621 = vmatprep.subr.mxu0 0.0
  %622 = vmatpush2.msra.mxu0 0.0
  %623 = vmatprep.subr.mxu0 0.0
  %624 = vmatpush2.msra.mxu0 0.0
  %625 = vmatprep.subr.mxu0 0.0
  %626 = vmatpush2.msra.mxu0 0.0
  %627 = vmatprep.subr.mxu0 0.0
  %628 = vmatpush2.msra.mxu0 0.0
  %629 = vmatprep.subr.mxu0 0.0
  %630 = vmatpush2.msra.mxu0 0.0
  %631 = vmatprep.subr.mxu0 0.0
  %632 = vmatpush2.msra.mxu0 0.0
  %633 = vmatprep.subr.mxu0 0.0
  %634 = vmatpush2.msra.mxu0 0.0
  %635 = vmatprep.subr.mxu0 0.0
  %636 = vmatpush2.msra.mxu0 0.0
  %637 = vmatprep.subr.mxu0 0.0
  %638 = vmatpush2.msra.mxu0 0.0
  %639 = vmatprep.subr.mxu0 0.0
  %640 = vmatpush2.msra.mxu0 0.0
  %641 = vmatprep.subr.mxu0 0.0
  %642 = vmatpush2.msra.mxu0 0.0
  %643 = vmatprep.subr.mxu0 0.0
  %644 = vmatpush2.msra.mxu0 0.0
  %645 = vmatprep.subr.mxu0 0.0
  %646 = vmatpush2.msra.mxu0 0.0
  %647 = vmatprep.subr.mxu0 0.0
  %648 = vmatpush2.msra.mxu0 0.0
  %649 = vmatprep.subr.mxu0 0.0
  %650 = vmatpush2.msra.mxu0 0.0
  %651 = vmatprep.subr.mxu0 0.0
  %652 = vmatpush2.msra.mxu0 0.0
  %653 = vmatprep.mubr.f32.mxu0 0.0
  %654 = vmatmul.mubr.f32.gmra.mxu0 %v490
  %v655 = vpop.f32.mrf.mxu0
  %v656 = vadd.f32 0.0, %v655
  %v657 = vpop.f32.mrf.mxu0
  %658 = vdwg.mxu0
  %v659 = vadd.f32 %v588, %v656
  %v660 = vxor.u32 %v659, 2147483648
  %v661 = vmul.f32 %v660, 1.442695
  %v662 = vpow.pop %v661
  %v663 = vadd.f32 %v662, 1.0
  %v664 = vrcp.pop %v663
  %v665 = vmul.f32 1.0, %v664
  %v666 = vtanh.pop %v659
  %v667 = vmul.f32 %v665, %v405
  %669 = vrot.lane.b32.xlu0 %v666, 64
  %v670 = vpop.permute.xlu0 %669
  %v672 = vmul.f32 %v665, %v670
  %674 = vrot.lane.b32.xlu0 %v672, 32
  %v675 = vpop.permute.xlu0 %674
  %v677 = vadd.f32 %v667, %v675
  %v678 = vtanh.pop %v677
  %680 = vrot.lane.b32.xlu0 %v678, 64
  %v681 = vpop.permute.xlu0 %680
  %v683 = vmul.f32 %v665, %v681
  %685 = vrot.lane.b32.xlu0 %v586, 32
  %v686 = vpop.permute.xlu0 %685
  %v687 = vsel %vm40, %v686, 0
  %689 = vmatprep.subr.mxu0 0.0
  %690 = vmatpush1.msra.mxu0 0.0
  %691 = vmatprep.subr.mxu0 0.0
  %692 = vmatpush1.msra.mxu0 0.0
  %693 = vmatprep.subr.mxu0 0.0
  %694 = vmatpush1.msra.mxu0 0.0
  %695 = vmatprep.subr.mxu0 0.0
  %696 = vmatpush1.msra.mxu0 0.0
  %697 = vmatprep.subr.mxu0 0.0
  %698 = vmatpush1.msra.mxu0 0.0
  %699 = vmatprep.subr.mxu0 0.0
  %700 = vmatpush1.msra.mxu0 0.0
  %701 = vmatprep.subr.mxu0 0.0
  %702 = vmatpush1.msra.mxu0 0.0
  %703 = vmatprep.subr.mxu0 0.0
  %704 = vmatpush1.msra.mxu0 0.0
  %705 = vmatprep.subr.mxu0 0.0
  %706 = vmatpush1.msra.mxu0 0.0
  %707 = vmatprep.subr.mxu0 0.0
  %708 = vmatpush1.msra.mxu0 0.0
  %709 = vmatprep.subr.mxu0 0.0
  %710 = vmatpush1.msra.mxu0 0.0
  %711 = vmatprep.subr.mxu0 0.0
  %712 = vmatpush1.msra.mxu0 0.0
  %713 = vmatprep.subr.mxu0 0.0
  %714 = vmatpush1.msra.mxu0 %v33
  %715 = vmatprep.subr.mxu0 0.0
  %716 = vmatpush1.msra.mxu0 %v32
  %717 = vmatprep.subr.mxu0 0.0
  %718 = vmatpush1.msra.mxu0 %v31
  %719 = vmatprep.subr.mxu0 0.0
  %720 = vmatpush1.msra.mxu0 %v30
  %721 = vmatprep.subr.mxu0 0.0
  %722 = vmatpush2.msra.mxu0 0.0
  %723 = vmatprep.subr.mxu0 0.0
  %724 = vmatpush2.msra.mxu0 0.0
  %725 = vmatprep.subr.mxu0 0.0
  %726 = vmatpush2.msra.mxu0 0.0
  %727 = vmatprep.subr.mxu0 0.0
  %728 = vmatpush2.msra.mxu0 0.0
  %729 = vmatprep.subr.mxu0 0.0
  %730 = vmatpush2.msra.mxu0 0.0
  %731 = vmatprep.subr.mxu0 0.0
  %732 = vmatpush2.msra.mxu0 0.0
  %733 = vmatprep.subr.mxu0 0.0
  %734 = vmatpush2.msra.mxu0 0.0
  %735 = vmatprep.subr.mxu0 0.0
  %736 = vmatpush2.msra.mxu0 0.0
  %737 = vmatprep.subr.mxu0 0.0
  %738 = vmatpush2.msra.mxu0 0.0
  %739 = vmatprep.subr.mxu0 0.0
  %740 = vmatpush2.msra.mxu0 0.0
  %741 = vmatprep.subr.mxu0 0.0
  %742 = vmatpush2.msra.mxu0 0.0
  %743 = vmatprep.subr.mxu0 0.0
  %744 = vmatpush2.msra.mxu0 0.0
  %745 = vmatprep.subr.mxu0 0.0
  %746 = vmatpush2.msra.mxu0 0.0
  %747 = vmatprep.subr.mxu0 0.0
  %748 = vmatpush2.msra.mxu0 0.0
  %749 = vmatprep.subr.mxu0 0.0
  %750 = vmatpush2.msra.mxu0 0.0
  %751 = vmatprep.subr.mxu0 0.0
  %752 = vmatpush2.msra.mxu0 0.0
  %753 = vmatprep.mubr.f32.mxu0 0.0
  %754 = vmatmul.mubr.f32.gmra.mxu0 %v687
  %v755 = vpop.f32.mrf.mxu0
  %v756 = vadd.f32 0.0, %v755
  %v757 = vpop.f32.mrf.mxu0
  %758 = vdwg.mxu0
  %760 = vrot.lane.b32.xlu0 %v683, 32
  %v761 = vpop.permute.xlu0 %760
  %v762 = vsel %vm40, %v761, 0
  %764 = vmatprep.subr.mxu0 0.0
  %765 = vmatpush1.msra.mxu0 0.0
  %766 = vmatprep.subr.mxu0 0.0
  %767 = vmatpush1.msra.mxu0 0.0
  %768 = vmatprep.subr.mxu0 0.0
  %769 = vmatpush1.msra.mxu0 0.0
  %770 = vmatprep.subr.mxu0 0.0
  %771 = vmatpush1.msra.mxu0 0.0
  %772 = vmatprep.subr.mxu0 0.0
  %773 = vmatpush1.msra.mxu0 0.0
  %774 = vmatprep.subr.mxu0 0.0
  %775 = vmatpush1.msra.mxu0 0.0
  %776 = vmatprep.subr.mxu0 0.0
  %777 = vmatpush1.msra.mxu0 0.0
  %778 = vmatprep.subr.mxu0 0.0
  %779 = vmatpush1.msra.mxu0 0.0
  %780 = vmatprep.subr.mxu0 0.0
  %781 = vmatpush1.msra.mxu0 0.0
  %782 = vmatprep.subr.mxu0 0.0
  %783 = vmatpush1.msra.mxu0 0.0
  %784 = vmatprep.subr.mxu0 0.0
  %785 = vmatpush1.msra.mxu0 0.0
  %786 = vmatprep.subr.mxu0 0.0
  %787 = vmatpush1.msra.mxu0 0.0
  %788 = vmatprep.subr.mxu0 0.0
  %789 = vmatpush1.msra.mxu0 %v37
  %790 = vmatprep.subr.mxu0 0.0
  %791 = vmatpush1.msra.mxu0 %v36
  %792 = vmatprep.subr.mxu0 0.0
  %793 = vmatpush1.msra.mxu0 %v35
  %794 = vmatprep.subr.mxu0 0.0
  %795 = vmatpush1.msra.mxu0 %v34
  %796 = vmatprep.subr.mxu0 0.0
  %797 = vmatpush2.msra.mxu0 0.0
  %798 = vmatprep.subr.mxu0 0.0
  %799 = vmatpush2.msra.mxu0 0.0
  %800 = vmatprep.subr.mxu0 0.0
  %801 = vmatpush2.msra.mxu0 0.0
  %802 = vmatprep.subr.mxu0 0.0
  %803 = vmatpush2.msra.mxu0 0.0
  %804 = vmatprep.subr.mxu0 0.0
  %805 = vmatpush2.msra.mxu0 0.0
  %806 = vmatprep.subr.mxu0 0.0
  %807 = vmatpush2.msra.mxu0 0.0
  %808 = vmatprep.subr.mxu0 0.0
  %809 = vmatpush2.msra.mxu0 0.0
  %810 = vmatprep.subr.mxu0 0.0
  %811 = vmatpush2.msra.mxu0 0.0
  %812 = vmatprep.subr.mxu0 0.0
  %813 = vmatpush2.msra.mxu0 0.0
  %814 = vmatprep.subr.mxu0 0.0
  %815 = vmatpush2.msra.mxu0 0.0
  %816 = vmatprep.subr.mxu0 0.0
  %817 = vmatpush2.msra.mxu0 0.0
  %818 = vmatprep.subr.mxu0 0.0
  %819 = vmatpush2.msra.mxu0 0.0
  %820 = vmatprep.subr.mxu0 0.0
  %821 = vmatpush2.msra.mxu0 0.0
  %822 = vmatprep.subr.mxu0 0.0
  %823 = vmatpush2.msra.mxu0 0.0
  %824 = vmatprep.subr.mxu0 0.0
  %825 = vmatpush2.msra.mxu0 0.0
  %826 = vmatprep.subr.mxu0 0.0
  %827 = vmatpush2.msra.mxu0 0.0
  %828 = vmatprep.mubr.f32.mxu0 0.0
  %829 = vmatmul.mubr.f32.gmra.mxu0 %v762
  %v830 = vpop.f32.mrf.mxu0
  %v831 = vadd.f32 %v756, %v830
  %v832 = vpop.f32.mrf.mxu0
  %833 = vdwg.mxu0
  %v834 = vadd.f32 %v831, %v288
  %v835 = vxor.u32 %v834, 2147483648
  %v836 = vmul.f32 %v835, 1.442695
  %v837 = vpow.pop %v836
  %v838 = vadd.f32 %v837, 1.0
  %v839 = vrcp.pop %v838
  %v840 = vmul.f32 1.0, %v839
  %v841 = vtanh.pop %v834
  %v842 = vmul.f32 %v840, %v580
  %844 = vrot.lane.b32.xlu0 %v841, 64
  %v845 = vpop.permute.xlu0 %844
  %v847 = vmul.f32 %v840, %v845
  %849 = vrot.lane.b32.xlu0 %v847, 32
  %v850 = vpop.permute.xlu0 %849
  %v852 = vadd.f32 %v842, %v850
  %v853 = vtanh.pop %v852
  %855 = vrot.lane.b32.xlu0 %v853, 64
  %v856 = vpop.permute.xlu0 %855
  %v858 = vmul.f32 %v840, %v856
  %s859 = scalar_lea.vmem %s0, 24
  %v860 = vld [vmem:[%s859] sm:$0xff]
  %861 = vmatprep.subr.mxu0 0.0
  %862 = vmatpush1.msra.mxu0 0.0
  %863 = vmatprep.subr.mxu0 0.0
  %864 = vmatpush1.msra.mxu0 0.0
  %865 = vmatprep.subr.mxu0 0.0
  %866 = vmatpush1.msra.mxu0 0.0
  %867 = vmatprep.subr.mxu0 0.0
  %868 = vmatpush1.msra.mxu0 0.0
  %869 = vmatprep.subr.mxu0 0.0
  %870 = vmatpush1.msra.mxu0 0.0
  %871 = vmatprep.subr.mxu0 0.0
  %872 = vmatpush1.msra.mxu0 0.0
  %873 = vmatprep.subr.mxu0 0.0
  %874 = vmatpush1.msra.mxu0 0.0
  %875 = vmatprep.subr.mxu0 0.0
  %876 = vmatpush1.msra.mxu0 0.0
  %877 = vmatprep.subr.mxu0 0.0
  %878 = vmatpush1.msra.mxu0 0.0
  %879 = vmatprep.subr.mxu0 0.0
  %880 = vmatpush1.msra.mxu0 0.0
  %881 = vmatprep.subr.mxu0 0.0
  %882 = vmatpush1.msra.mxu0 0.0
  %883 = vmatprep.subr.mxu0 0.0
  %884 = vmatpush1.msra.mxu0 0.0
  %885 = vmatprep.subr.mxu0 0.0
  %886 = vmatpush1.msra.mxu0 %v28
  %887 = vmatprep.subr.mxu0 0.0
  %888 = vmatpush1.msra.mxu0 %v27
  %889 = vmatprep.subr.mxu0 0.0
  %890 = vmatpush1.msra.mxu0 %v26
  %891 = vmatprep.subr.mxu0 0.0
  %892 = vmatpush1.msra.mxu0 %v25
  %893 = vmatprep.subr.mxu0 0.0
  %894 = vmatpush2.msra.mxu0 0.0
  %895 = vmatprep.subr.mxu0 0.0
  %896 = vmatpush2.msra.mxu0 0.0
  %897 = vmatprep.subr.mxu0 0.0
  %898 = vmatpush2.msra.mxu0 0.0
  %899 = vmatprep.subr.mxu0 0.0
  %900 = vmatpush2.msra.mxu0 0.0
  %901 = vmatprep.subr.mxu0 0.0
  %902 = vmatpush2.msra.mxu0 0.0
  %903 = vmatprep.subr.mxu0 0.0
  %904 = vmatpush2.msra.mxu0 0.0
  %905 = vmatprep.subr.mxu0 0.0
  %906 = vmatpush2.msra.mxu0 0.0
  %907 = vmatprep.subr.mxu0 0.0
  %908 = vmatpush2.msra.mxu0 0.0
  %909 = vmatprep.subr.mxu0 0.0
  %910 = vmatpush2.msra.mxu0 0.0
  %911 = vmatprep.subr.mxu0 0.0
  %912 = vmatpush2.msra.mxu0 0.0
  %913 = vmatprep.subr.mxu0 0.0
  %914 = vmatpush2.msra.mxu0 0.0
  %915 = vmatprep.subr.mxu0 0.0
  %916 = vmatpush2.msra.mxu0 0.0
  %917 = vmatprep.subr.mxu0 0.0
  %918 = vmatpush2.msra.mxu0 0.0
  %919 = vmatprep.subr.mxu0 0.0
  %920 = vmatpush2.msra.mxu0 0.0
  %921 = vmatprep.subr.mxu0 0.0
  %922 = vmatpush2.msra.mxu0 0.0
  %923 = vmatprep.subr.mxu0 0.0
  %924 = vmatpush2.msra.mxu0 0.0
  %925 = vmatprep.mubr.f32.mxu0 0.0
  %926 = vmatmul.mubr.f32.gmra.mxu0 %v762
  %v927 = vpop.f32.mrf.mxu0
  %v928 = vadd.f32 0.0, %v927
  %v929 = vpop.f32.mrf.mxu0
  %930 = vdwg.mxu0
  %v931 = vadd.f32 %v860, %v928
  %v932 = vxor.u32 %v931, 2147483648
  %v933 = vmul.f32 %v932, 1.442695
  %v934 = vpow.pop %v933
  %v935 = vadd.f32 %v934, 1.0
  %v936 = vrcp.pop %v935
  %v937 = vmul.f32 1.0, %v936
  %v938 = vtanh.pop %v931
  %v939 = vmul.f32 %v937, %v677
  %941 = vrot.lane.b32.xlu0 %v938, 64
  %v942 = vpop.permute.xlu0 %941
  %v944 = vmul.f32 %v937, %v942
  %946 = vrot.lane.b32.xlu0 %v944, 32
  %v947 = vpop.permute.xlu0 %946
  %v949 = vadd.f32 %v939, %v947
  %v950 = vtanh.pop %v949
  %952 = vrot.lane.b32.xlu0 %v950, 64
  %v953 = vpop.permute.xlu0 %952
  %v955 = vmul.f32 %v937, %v953
  %957 = vrot.lane.b32.xlu0 %v858, 32
  %v958 = vpop.permute.xlu0 %957
  %v959 = vsel %vm40, %v958, 0
  %961 = vmatprep.subr.mxu0 0.0
  %962 = vmatpush1.msra.mxu0 0.0
  %963 = vmatprep.subr.mxu0 0.0
  %964 = vmatpush1.msra.mxu0 0.0
  %965 = vmatprep.subr.mxu0 0.0
  %966 = vmatpush1.msra.mxu0 0.0
  %967 = vmatprep.subr.mxu0 0.0
  %968 = vmatpush1.msra.mxu0 0.0
  %969 = vmatprep.subr.mxu0 0.0
  %970 = vmatpush1.msra.mxu0 0.0
  %971 = vmatprep.subr.mxu0 0.0
  %972 = vmatpush1.msra.mxu0 0.0
  %973 = vmatprep.subr.mxu0 0.0
  %974 = vmatpush1.msra.mxu0 0.0
  %975 = vmatprep.subr.mxu0 0.0
  %976 = vmatpush1.msra.mxu0 0.0
  %977 = vmatprep.subr.mxu0 0.0
  %978 = vmatpush1.msra.mxu0 0.0
  %979 = vmatprep.subr.mxu0 0.0
  %980 = vmatpush1.msra.mxu0 0.0
  %981 = vmatprep.subr.mxu0 0.0
  %982 = vmatpush1.msra.mxu0 0.0
  %983 = vmatprep.subr.mxu0 0.0
  %984 = vmatpush1.msra.mxu0 0.0
  %985 = vmatprep.subr.mxu0 0.0
  %986 = vmatpush1.msra.mxu0 %v33
  %987 = vmatprep.subr.mxu0 0.0
  %988 = vmatpush1.msra.mxu0 %v32
  %989 = vmatprep.subr.mxu0 0.0
  %990 = vmatpush1.msra.mxu0 %v31
  %991 = vmatprep.subr.mxu0 0.0
  %992 = vmatpush1.msra.mxu0 %v30
  %993 = vmatprep.subr.mxu0 0.0
  %994 = vmatpush2.msra.mxu0 0.0
  %995 = vmatprep.subr.mxu0 0.0
  %996 = vmatpush2.msra.mxu0 0.0
  %997 = vmatprep.subr.mxu0 0.0
  %998 = vmatpush2.msra.mxu0 0.0
  %999 = vmatprep.subr.mxu0 0.0
  %1000 = vmatpush2.msra.mxu0 0.0
  %1001 = vmatprep.subr.mxu0 0.0
  %1002 = vmatpush2.msra.mxu0 0.0
  %1003 = vmatprep.subr.mxu0 0.0
  %1004 = vmatpush2.msra.mxu0 0.0
  %1005 = vmatprep.subr.mxu0 0.0
  %1006 = vmatpush2.msra.mxu0 0.0
  %1007 = vmatprep.subr.mxu0 0.0
  %1008 = vmatpush2.msra.mxu0 0.0
  %1009 = vmatprep.subr.mxu0 0.0
  %1010 = vmatpush2.msra.mxu0 0.0
  %1011 = vmatprep.subr.mxu0 0.0
  %1012 = vmatpush2.msra.mxu0 0.0
  %1013 = vmatprep.subr.mxu0 0.0
  %1014 = vmatpush2.msra.mxu0 0.0
  %1015 = vmatprep.subr.mxu0 0.0
  %1016 = vmatpush2.msra.mxu0 0.0
  %1017 = vmatprep.subr.mxu0 0.0
  %1018 = vmatpush2.msra.mxu0 0.0
  %1019 = vmatprep.subr.mxu0 0.0
  %1020 = vmatpush2.msra.mxu0 0.0
  %1021 = vmatprep.subr.mxu0 0.0
  %1022 = vmatpush2.msra.mxu0 0.0
  %1023 = vmatprep.subr.mxu0 0.0
  %1024 = vmatpush2.msra.mxu0 0.0
  %1025 = vmatprep.mubr.f32.mxu0 0.0
  %1026 = vmatmul.mubr.f32.gmra.mxu0 %v959
  %v1027 = vpop.f32.mrf.mxu0
  %v1028 = vadd.f32 0.0, %v1027
  %v1029 = vpop.f32.mrf.mxu0
  %1030 = vdwg.mxu0
  %1032 = vrot.lane.b32.xlu0 %v955, 32
  %v1033 = vpop.permute.xlu0 %1032
  %v1034 = vsel %vm40, %v1033, 0
  %1036 = vmatprep.subr.mxu0 0.0
  %1037 = vmatpush1.msra.mxu0 0.0
  %1038 = vmatprep.subr.mxu0 0.0
  %1039 = vmatpush1.msra.mxu0 0.0
  %1040 = vmatprep.subr.mxu0 0.0
  %1041 = vmatpush1.msra.mxu0 0.0
  %1042 = vmatprep.subr.mxu0 0.0
  %1043 = vmatpush1.msra.mxu0 0.0
  %1044 = vmatprep.subr.mxu0 0.0
  %1045 = vmatpush1.msra.mxu0 0.0
  %1046 = vmatprep.subr.mxu0 0.0
  %1047 = vmatpush1.msra.mxu0 0.0
  %1048 = vmatprep.subr.mxu0 0.0
  %1049 = vmatpush1.msra.mxu0 0.0
  %1050 = vmatprep.subr.mxu0 0.0
  %1051 = vmatpush1.msra.mxu0 0.0
  %1052 = vmatprep.subr.mxu0 0.0
  %1053 = vmatpush1.msra.mxu0 0.0
  %1054 = vmatprep.subr.mxu0 0.0
  %1055 = vmatpush1.msra.mxu0 0.0
  %1056 = vmatprep.subr.mxu0 0.0
  %1057 = vmatpush1.msra.mxu0 0.0
  %1058 = vmatprep.subr.mxu0 0.0
  %1059 = vmatpush1.msra.mxu0 0.0
  %1060 = vmatprep.subr.mxu0 0.0
  %1061 = vmatpush1.msra.mxu0 %v37
  %1062 = vmatprep.subr.mxu0 0.0
  %1063 = vmatpush1.msra.mxu0 %v36
  %1064 = vmatprep.subr.mxu0 0.0
  %1065 = vmatpush1.msra.mxu0 %v35
  %1066 = vmatprep.subr.mxu0 0.0
  %1067 = vmatpush1.msra.mxu0 %v34
  %1068 = vmatprep.subr.mxu0 0.0
  %1069 = vmatpush2.msra.mxu0 0.0
  %1070 = vmatprep.subr.mxu0 0.0
  %1071 = vmatpush2.msra.mxu0 0.0
  %1072 = vmatprep.subr.mxu0 0.0
  %1073 = vmatpush2.msra.mxu0 0.0
  %1074 = vmatprep.subr.mxu0 0.0
  %1075 = vmatpush2.msra.mxu0 0.0
  %1076 = vmatprep.subr.mxu0 0.0
  %1077 = vmatpush2.msra.mxu0 0.0
  %1078 = vmatprep.subr.mxu0 0.0
  %1079 = vmatpush2.msra.mxu0 0.0
  %1080 = vmatprep.subr.mxu0 0.0
  %1081 = vmatpush2.msra.mxu0 0.0
  %1082 = vmatprep.subr.mxu0 0.0
  %1083 = vmatpush2.msra.mxu0 0.0
  %1084 = vmatprep.subr.mxu0 0.0
  %1085 = vmatpush2.msra.mxu0 0.0
  %1086 = vmatprep.subr.mxu0 0.0
  %1087 = vmatpush2.msra.mxu0 0.0
  %1088 = vmatprep.subr.mxu0 0.0
  %1089 = vmatpush2.msra.mxu0 0.0
  %1090 = vmatprep.subr.mxu0 0.0
  %1091 = vmatpush2.msra.mxu0 0.0
  %1092 = vmatprep.subr.mxu0 0.0
  %1093 = vmatpush2.msra.mxu0 0.0
  %1094 = vmatprep.subr.mxu0 0.0
  %1095 = vmatpush2.msra.mxu0 0.0
  %1096 = vmatprep.subr.mxu0 0.0
  %1097 = vmatpush2.msra.mxu0 0.0
  %1098 = vmatprep.subr.mxu0 0.0
  %1099 = vmatpush2.msra.mxu0 0.0
  %1100 = vmatprep.mubr.f32.mxu0 0.0
  %1101 = vmatmul.mubr.f32.gmra.mxu0 %v1034
  %v1102 = vpop.f32.mrf.mxu0
  %v1103 = vadd.f32 %v1028, %v1102
  %v1104 = vpop.f32.mrf.mxu0
  %1105 = vdwg.mxu0
  %v1106 = vadd.f32 %v1103, %v288
  %v1107 = vxor.u32 %v1106, 2147483648
  %v1108 = vmul.f32 %v1107, 1.442695
  %v1109 = vpow.pop %v1108
  %v1110 = vadd.f32 %v1109, 1.0
  %v1111 = vrcp.pop %v1110
  %v1112 = vmul.f32 1.0, %v1111
  %v1113 = vtanh.pop %v1106
  %v1114 = vmul.f32 %v1112, %v852
  %1116 = vrot.lane.b32.xlu0 %v1113, 64
  %v1117 = vpop.permute.xlu0 %1116
  %v1119 = vmul.f32 %v1112, %v1117
  %1121 = vrot.lane.b32.xlu0 %v1119, 32
  %v1122 = vpop.permute.xlu0 %1121
  %v1124 = vadd.f32 %v1114, %v1122
  %v1125 = vtanh.pop %v1124
  %1127 = vrot.lane.b32.xlu0 %v1125, 64
  %v1128 = vpop.permute.xlu0 %1127
  %v1130 = vmul.f32 %v1112, %v1128
  %s1131 = scalar_lea.vmem %s0, 32
  %v1132 = vld [vmem:[%s1131] sm:$0xff]
  %1133 = vmatprep.subr.mxu0 0.0
  %1134 = vmatpush1.msra.mxu0 0.0
  %1135 = vmatprep.subr.mxu0 0.0
  %1136 = vmatpush1.msra.mxu0 0.0
  %1137 = vmatprep.subr.mxu0 0.0
  %1138 = vmatpush1.msra.mxu0 0.0
  %1139 = vmatprep.subr.mxu0 0.0
  %1140 = vmatpush1.msra.mxu0 0.0
  %1141 = vmatprep.subr.mxu0 0.0
  %1142 = vmatpush1.msra.mxu0 0.0
  %1143 = vmatprep.subr.mxu0 0.0
  %1144 = vmatpush1.msra.mxu0 0.0
  %1145 = vmatprep.subr.mxu0 0.0
  %1146 = vmatpush1.msra.mxu0 0.0
  %1147 = vmatprep.subr.mxu0 0.0
  %1148 = vmatpush1.msra.mxu0 0.0
  %1149 = vmatprep.subr.mxu0 0.0
  %1150 = vmatpush1.msra.mxu0 0.0
  %1151 = vmatprep.subr.mxu0 0.0
  %1152 = vmatpush1.msra.mxu0 0.0
  %1153 = vmatprep.subr.mxu0 0.0
  %1154 = vmatpush1.msra.mxu0 0.0
  %1155 = vmatprep.subr.mxu0 0.0
  %1156 = vmatpush1.msra.mxu0 0.0
  %1157 = vmatprep.subr.mxu0 0.0
  %1158 = vmatpush1.msra.mxu0 %v28
  %1159 = vmatprep.subr.mxu0 0.0
  %1160 = vmatpush1.msra.mxu0 %v27
  %1161 = vmatprep.subr.mxu0 0.0
  %1162 = vmatpush1.msra.mxu0 %v26
  %1163 = vmatprep.subr.mxu0 0.0
  %1164 = vmatpush1.msra.mxu0 %v25
  %1165 = vmatprep.subr.mxu0 0.0
  %1166 = vmatpush2.msra.mxu0 0.0
  %1167 = vmatprep.subr.mxu0 0.0
  %1168 = vmatpush2.msra.mxu0 0.0
  %1169 = vmatprep.subr.mxu0 0.0
  %1170 = vmatpush2.msra.mxu0 0.0
  %1171 = vmatprep.subr.mxu0 0.0
  %1172 = vmatpush2.msra.mxu0 0.0
  %1173 = vmatprep.subr.mxu0 0.0
  %1174 = vmatpush2.msra.mxu0 0.0
  %1175 = vmatprep.subr.mxu0 0.0
  %1176 = vmatpush2.msra.mxu0 0.0
  %1177 = vmatprep.subr.mxu0 0.0
  %1178 = vmatpush2.msra.mxu0 0.0
  %1179 = vmatprep.subr.mxu0 0.0
  %1180 = vmatpush2.msra.mxu0 0.0
  %1181 = vmatprep.subr.mxu0 0.0
  %1182 = vmatpush2.msra.mxu0 0.0
  %1183 = vmatprep.subr.mxu0 0.0
  %1184 = vmatpush2.msra.mxu0 0.0
  %1185 = vmatprep.subr.mxu0 0.0
  %1186 = vmatpush2.msra.mxu0 0.0
  %1187 = vmatprep.subr.mxu0 0.0
  %1188 = vmatpush2.msra.mxu0 0.0
  %1189 = vmatprep.subr.mxu0 0.0
  %1190 = vmatpush2.msra.mxu0 0.0
  %1191 = vmatprep.subr.mxu0 0.0
  %1192 = vmatpush2.msra.mxu0 0.0
  %1193 = vmatprep.subr.mxu0 0.0
  %1194 = vmatpush2.msra.mxu0 0.0
  %1195 = vmatprep.subr.mxu0 0.0
  %1196 = vmatpush2.msra.mxu0 0.0
  %1197 = vmatprep.mubr.f32.mxu0 0.0
  %1198 = vmatmul.mubr.f32.gmra.mxu0 %v1034
  %v1199 = vpop.f32.mrf.mxu0
  %v1200 = vadd.f32 0.0, %v1199
  %v1201 = vpop.f32.mrf.mxu0
  %1202 = vdwg.mxu0
  %v1203 = vadd.f32 %v1132, %v1200
  %v1204 = vxor.u32 %v1203, 2147483648
  %v1205 = vmul.f32 %v1204, 1.442695
  %v1206 = vpow.pop %v1205
  %v1207 = vadd.f32 %v1206, 1.0
  %v1208 = vrcp.pop %v1207
  %v1209 = vmul.f32 1.0, %v1208
  %v1210 = vtanh.pop %v1203
  %v1211 = vmul.f32 %v1209, %v949
  %1213 = vrot.lane.b32.xlu0 %v1210, 64
  %v1214 = vpop.permute.xlu0 %1213
  %v1216 = vmul.f32 %v1209, %v1214
  %1218 = vrot.lane.b32.xlu0 %v1216, 32
  %v1219 = vpop.permute.xlu0 %1218
  %v1221 = vadd.f32 %v1211, %v1219
  %v1222 = vtanh.pop %v1221
  %1224 = vrot.lane.b32.xlu0 %v1222, 64
  %v1225 = vpop.permute.xlu0 %1224
  %v1227 = vmul.f32 %v1209, %v1225
  %1229 = vrot.lane.b32.xlu0 %v1130, 32
  %v1230 = vpop.permute.xlu0 %1229
  %v1231 = vsel %vm40, %v1230, 0
  %1233 = vmatprep.subr.mxu0 0.0
  %1234 = vmatpush1.msra.mxu0 0.0
  %1235 = vmatprep.subr.mxu0 0.0
  %1236 = vmatpush1.msra.mxu0 0.0
  %1237 = vmatprep.subr.mxu0 0.0
  %1238 = vmatpush1.msra.mxu0 0.0
  %1239 = vmatprep.subr.mxu0 0.0
  %1240 = vmatpush1.msra.mxu0 0.0
  %1241 = vmatprep.subr.mxu0 0.0
  %1242 = vmatpush1.msra.mxu0 0.0
  %1243 = vmatprep.subr.mxu0 0.0
  %1244 = vmatpush1.msra.mxu0 0.0
  %1245 = vmatprep.subr.mxu0 0.0
  %1246 = vmatpush1.msra.mxu0 0.0
  %1247 = vmatprep.subr.mxu0 0.0
  %1248 = vmatpush1.msra.mxu0 0.0
  %1249 = vmatprep.subr.mxu0 0.0
  %1250 = vmatpush1.msra.mxu0 0.0
  %1251 = vmatprep.subr.mxu0 0.0
  %1252 = vmatpush1.msra.mxu0 0.0
  %1253 = vmatprep.subr.mxu0 0.0
  %1254 = vmatpush1.msra.mxu0 0.0
  %1255 = vmatprep.subr.mxu0 0.0
  %1256 = vmatpush1.msra.mxu0 0.0
  %1257 = vmatprep.subr.mxu0 0.0
  %1258 = vmatpush1.msra.mxu0 %v33
  %1259 = vmatprep.subr.mxu0 0.0
  %1260 = vmatpush1.msra.mxu0 %v32
  %1261 = vmatprep.subr.mxu0 0.0
  %1262 = vmatpush1.msra.mxu0 %v31
  %1263 = vmatprep.subr.mxu0 0.0
  %1264 = vmatpush1.msra.mxu0 %v30
  %1265 = vmatprep.subr.mxu0 0.0
  %1266 = vmatpush2.msra.mxu0 0.0
  %1267 = vmatprep.subr.mxu0 0.0
  %1268 = vmatpush2.msra.mxu0 0.0
  %1269 = vmatprep.subr.mxu0 0.0
  %1270 = vmatpush2.msra.mxu0 0.0
  %1271 = vmatprep.subr.mxu0 0.0
  %1272 = vmatpush2.msra.mxu0 0.0
  %1273 = vmatprep.subr.mxu0 0.0
  %1274 = vmatpush2.msra.mxu0 0.0
  %1275 = vmatprep.subr.mxu0 0.0
  %1276 = vmatpush2.msra.mxu0 0.0
  %1277 = vmatprep.subr.mxu0 0.0
  %1278 = vmatpush2.msra.mxu0 0.0
  %1279 = vmatprep.subr.mxu0 0.0
  %1280 = vmatpush2.msra.mxu0 0.0
  %1281 = vmatprep.subr.mxu0 0.0
  %1282 = vmatpush2.msra.mxu0 0.0
  %1283 = vmatprep.subr.mxu0 0.0
  %1284 = vmatpush2.msra.mxu0 0.0
  %1285 = vmatprep.subr.mxu0 0.0
  %1286 = vmatpush2.msra.mxu0 0.0
  %1287 = vmatprep.subr.mxu0 0.0
  %1288 = vmatpush2.msra.mxu0 0.0
  %1289 = vmatprep.subr.mxu0 0.0
  %1290 = vmatpush2.msra.mxu0 0.0
  %1291 = vmatprep.subr.mxu0 0.0
  %1292 = vmatpush2.msra.mxu0 0.0
  %1293 = vmatprep.subr.mxu0 0.0
  %1294 = vmatpush2.msra.mxu0 0.0
  %1295 = vmatprep.subr.mxu0 0.0
  %1296 = vmatpush2.msra.mxu0 0.0
  %1297 = vmatprep.mubr.f32.mxu0 0.0
  %1298 = vmatmul.mubr.f32.gmra.mxu0 %v1231
  %v1299 = vpop.f32.mrf.mxu0
  %v1300 = vadd.f32 0.0, %v1299
  %v1301 = vpop.f32.mrf.mxu0
  %1302 = vdwg.mxu0
  %1304 = vrot.lane.b32.xlu0 %v1227, 32
  %v1305 = vpop.permute.xlu0 %1304
  %v1306 = vsel %vm40, %v1305, 0
  %1308 = vmatprep.subr.mxu0 0.0
  %1309 = vmatpush1.msra.mxu0 0.0
  %1310 = vmatprep.subr.mxu0 0.0
  %1311 = vmatpush1.msra.mxu0 0.0
  %1312 = vmatprep.subr.mxu0 0.0
  %1313 = vmatpush1.msra.mxu0 0.0
  %1314 = vmatprep.subr.mxu0 0.0
  %1315 = vmatpush1.msra.mxu0 0.0
  %1316 = vmatprep.subr.mxu0 0.0
  %1317 = vmatpush1.msra.mxu0 0.0
  %1318 = vmatprep.subr.mxu0 0.0
  %1319 = vmatpush1.msra.mxu0 0.0
  %1320 = vmatprep.subr.mxu0 0.0
  %1321 = vmatpush1.msra.mxu0 0.0
  %1322 = vmatprep.subr.mxu0 0.0
  %1323 = vmatpush1.msra.mxu0 0.0
  %1324 = vmatprep.subr.mxu0 0.0
  %1325 = vmatpush1.msra.mxu0 0.0
  %1326 = vmatprep.subr.mxu0 0.0
  %1327 = vmatpush1.msra.mxu0 0.0
  %1328 = vmatprep.subr.mxu0 0.0
  %1329 = vmatpush1.msra.mxu0 0.0
  %1330 = vmatprep.subr.mxu0 0.0
  %1331 = vmatpush1.msra.mxu0 0.0
  %1332 = vmatprep.subr.mxu0 0.0
  %1333 = vmatpush1.msra.mxu0 %v37
  %1334 = vmatprep.subr.mxu0 0.0
  %1335 = vmatpush1.msra.mxu0 %v36
  %1336 = vmatprep.subr.mxu0 0.0
  %1337 = vmatpush1.msra.mxu0 %v35
  %1338 = vmatprep.subr.mxu0 0.0
  %1339 = vmatpush1.msra.mxu0 %v34
  %1340 = vmatprep.subr.mxu0 0.0
  %1341 = vmatpush2.msra.mxu0 0.0
  %1342 = vmatprep.subr.mxu0 0.0
  %1343 = vmatpush2.msra.mxu0 0.0
  %1344 = vmatprep.subr.mxu0 0.0
  %1345 = vmatpush2.msra.mxu0 0.0
  %1346 = vmatprep.subr.mxu0 0.0
  %1347 = vmatpush2.msra.mxu0 0.0
  %1348 = vmatprep.subr.mxu0 0.0
  %1349 = vmatpush2.msra.mxu0 0.0
  %1350 = vmatprep.subr.mxu0 0.0
  %1351 = vmatpush2.msra.mxu0 0.0
  %1352 = vmatprep.subr.mxu0 0.0
  %1353 = vmatpush2.msra.mxu0 0.0
  %1354 = vmatprep.subr.mxu0 0.0
  %1355 = vmatpush2.msra.mxu0 0.0
  %1356 = vmatprep.subr.mxu0 0.0
  %1357 = vmatpush2.msra.mxu0 0.0
  %1358 = vmatprep.subr.mxu0 0.0
  %1359 = vmatpush2.msra.mxu0 0.0
  %1360 = vmatprep.subr.mxu0 0.0
  %1361 = vmatpush2.msra.mxu0 0.0
  %1362 = vmatprep.subr.mxu0 0.0
  %1363 = vmatpush2.msra.mxu0 0.0
  %1364 = vmatprep.subr.mxu0 0.0
  %1365 = vmatpush2.msra.mxu0 0.0
  %1366 = vmatprep.subr.mxu0 0.0
  %1367 = vmatpush2.msra.mxu0 0.0
  %1368 = vmatprep.subr.mxu0 0.0
  %1369 = vmatpush2.msra.mxu0 0.0
  %1370 = vmatprep.subr.mxu0 0.0
  %1371 = vmatpush2.msra.mxu0 0.0
  %1372 = vmatprep.mubr.f32.mxu0 0.0
  %1373 = vmatmul.mubr.f32.gmra.mxu0 %v1306
  %v1374 = vpop.f32.mrf.mxu0
  %v1375 = vadd.f32 %v1300, %v1374
  %v1376 = vpop.f32.mrf.mxu0
  %1377 = vdwg.mxu0
  %v1378 = vadd.f32 %v1375, %v288
  %v1379 = vxor.u32 %v1378, 2147483648
  %v1380 = vmul.f32 %v1379, 1.442695
  %v1381 = vpow.pop %v1380
  %v1382 = vadd.f32 %v1381, 1.0
  %v1383 = vrcp.pop %v1382
  %v1384 = vmul.f32 1.0, %v1383
  %v1385 = vtanh.pop %v1378
  %v1386 = vmul.f32 %v1384, %v1124
  %1388 = vrot.lane.b32.xlu0 %v1385, 64
  %v1389 = vpop.permute.xlu0 %1388
  %v1391 = vmul.f32 %v1384, %v1389
  %1393 = vrot.lane.b32.xlu0 %v1391, 32
  %v1394 = vpop.permute.xlu0 %1393
  %v1396 = vadd.f32 %v1386, %v1394
  %v1397 = vtanh.pop %v1396
  %1399 = vrot.lane.b32.xlu0 %v1397, 64
  %v1400 = vpop.permute.xlu0 %1399
  %v1402 = vmul.f32 %v1384, %v1400
  %s1403 = scalar_lea.vmem %s0, 40
  %v1404 = vld [vmem:[%s1403] sm:$0xff]
  %1405 = vmatprep.subr.mxu0 0.0
  %1406 = vmatpush1.msra.mxu0 0.0
  %1407 = vmatprep.subr.mxu0 0.0
  %1408 = vmatpush1.msra.mxu0 0.0
  %1409 = vmatprep.subr.mxu0 0.0
  %1410 = vmatpush1.msra.mxu0 0.0
  %1411 = vmatprep.subr.mxu0 0.0
  %1412 = vmatpush1.msra.mxu0 0.0
  %1413 = vmatprep.subr.mxu0 0.0
  %1414 = vmatpush1.msra.mxu0 0.0
  %1415 = vmatprep.subr.mxu0 0.0
  %1416 = vmatpush1.msra.mxu0 0.0
  %1417 = vmatprep.subr.mxu0 0.0
  %1418 = vmatpush1.msra.mxu0 0.0
  %1419 = vmatprep.subr.mxu0 0.0
  %1420 = vmatpush1.msra.mxu0 0.0
  %1421 = vmatprep.subr.mxu0 0.0
  %1422 = vmatpush1.msra.mxu0 0.0
  %1423 = vmatprep.subr.mxu0 0.0
  %1424 = vmatpush1.msra.mxu0 0.0
  %1425 = vmatprep.subr.mxu0 0.0
  %1426 = vmatpush1.msra.mxu0 0.0
  %1427 = vmatprep.subr.mxu0 0.0
  %1428 = vmatpush1.msra.mxu0 0.0
  %1429 = vmatprep.subr.mxu0 0.0
  %1430 = vmatpush1.msra.mxu0 %v28
  %1431 = vmatprep.subr.mxu0 0.0
  %1432 = vmatpush1.msra.mxu0 %v27
  %1433 = vmatprep.subr.mxu0 0.0
  %1434 = vmatpush1.msra.mxu0 %v26
  %1435 = vmatprep.subr.mxu0 0.0
  %1436 = vmatpush1.msra.mxu0 %v25
  %1437 = vmatprep.subr.mxu0 0.0
  %1438 = vmatpush2.msra.mxu0 0.0
  %1439 = vmatprep.subr.mxu0 0.0
  %1440 = vmatpush2.msra.mxu0 0.0
  %1441 = vmatprep.subr.mxu0 0.0
  %1442 = vmatpush2.msra.mxu0 0.0
  %1443 = vmatprep.subr.mxu0 0.0
  %1444 = vmatpush2.msra.mxu0 0.0
  %1445 = vmatprep.subr.mxu0 0.0
  %1446 = vmatpush2.msra.mxu0 0.0
  %1447 = vmatprep.subr.mxu0 0.0
  %1448 = vmatpush2.msra.mxu0 0.0
  %1449 = vmatprep.subr.mxu0 0.0
  %1450 = vmatpush2.msra.mxu0 0.0
  %1451 = vmatprep.subr.mxu0 0.0
  %1452 = vmatpush2.msra.mxu0 0.0
  %1453 = vmatprep.subr.mxu0 0.0
  %1454 = vmatpush2.msra.mxu0 0.0
  %1455 = vmatprep.subr.mxu0 0.0
  %1456 = vmatpush2.msra.mxu0 0.0
  %1457 = vmatprep.subr.mxu0 0.0
  %1458 = vmatpush2.msra.mxu0 0.0
  %1459 = vmatprep.subr.mxu0 0.0
  %1460 = vmatpush2.msra.mxu0 0.0
  %1461 = vmatprep.subr.mxu0 0.0
  %1462 = vmatpush2.msra.mxu0 0.0
  %1463 = vmatprep.subr.mxu0 0.0
  %1464 = vmatpush2.msra.mxu0 0.0
  %1465 = vmatprep.subr.mxu0 0.0
  %1466 = vmatpush2.msra.mxu0 0.0
  %1467 = vmatprep.subr.mxu0 0.0
  %1468 = vmatpush2.msra.mxu0 0.0
  %1469 = vmatprep.mubr.f32.mxu0 0.0
  %1470 = vmatmul.mubr.f32.gmra.mxu0 %v1306
  %v1471 = vpop.f32.mrf.mxu0
  %v1472 = vadd.f32 0.0, %v1471
  %v1473 = vpop.f32.mrf.mxu0
  %1474 = vdwg.mxu0
  %v1475 = vadd.f32 %v1404, %v1472
  %v1476 = vxor.u32 %v1475, 2147483648
  %v1477 = vmul.f32 %v1476, 1.442695
  %v1478 = vpow.pop %v1477
  %v1479 = vadd.f32 %v1478, 1.0
  %v1480 = vrcp.pop %v1479
  %v1481 = vmul.f32 1.0, %v1480
  %v1482 = vtanh.pop %v1475
  %v1483 = vmul.f32 %v1481, %v1221
  %1485 = vrot.lane.b32.xlu0 %v1482, 64
  %v1486 = vpop.permute.xlu0 %1485
  %v1488 = vmul.f32 %v1481, %v1486
  %1490 = vrot.lane.b32.xlu0 %v1488, 32
  %v1491 = vpop.permute.xlu0 %1490
  %v1493 = vadd.f32 %v1483, %v1491
  %v1494 = vtanh.pop %v1493
  %1496 = vrot.lane.b32.xlu0 %v1494, 64
  %v1497 = vpop.permute.xlu0 %1496
  %v1499 = vmul.f32 %v1481, %v1497
  %1501 = vrot.lane.b32.xlu0 %v1402, 32
  %v1502 = vpop.permute.xlu0 %1501
  %v1503 = vsel %vm40, %v1502, 0
  %1505 = vmatprep.subr.mxu0 0.0
  %1506 = vmatpush1.msra.mxu0 0.0
  %1507 = vmatprep.subr.mxu0 0.0
  %1508 = vmatpush1.msra.mxu0 0.0
  %1509 = vmatprep.subr.mxu0 0.0
  %1510 = vmatpush1.msra.mxu0 0.0
  %1511 = vmatprep.subr.mxu0 0.0
  %1512 = vmatpush1.msra.mxu0 0.0
  %1513 = vmatprep.subr.mxu0 0.0
  %1514 = vmatpush1.msra.mxu0 0.0
  %1515 = vmatprep.subr.mxu0 0.0
  %1516 = vmatpush1.msra.mxu0 0.0
  %1517 = vmatprep.subr.mxu0 0.0
  %1518 = vmatpush1.msra.mxu0 0.0
  %1519 = vmatprep.subr.mxu0 0.0
  %1520 = vmatpush1.msra.mxu0 0.0
  %1521 = vmatprep.subr.mxu0 0.0
  %1522 = vmatpush1.msra.mxu0 0.0
  %1523 = vmatprep.subr.mxu0 0.0
  %1524 = vmatpush1.msra.mxu0 0.0
  %1525 = vmatprep.subr.mxu0 0.0
  %1526 = vmatpush1.msra.mxu0 0.0
  %1527 = vmatprep.subr.mxu0 0.0
  %1528 = vmatpush1.msra.mxu0 0.0
  %1529 = vmatprep.subr.mxu0 0.0
  %1530 = vmatpush1.msra.mxu0 %v33
  %1531 = vmatprep.subr.mxu0 0.0
  %1532 = vmatpush1.msra.mxu0 %v32
  %1533 = vmatprep.subr.mxu0 0.0
  %1534 = vmatpush1.msra.mxu0 %v31
  %1535 = vmatprep.subr.mxu0 0.0
  %1536 = vmatpush1.msra.mxu0 %v30
  %1537 = vmatprep.subr.mxu0 0.0
  %1538 = vmatpush2.msra.mxu0 0.0
  %1539 = vmatprep.subr.mxu0 0.0
  %1540 = vmatpush2.msra.mxu0 0.0
  %1541 = vmatprep.subr.mxu0 0.0
  %1542 = vmatpush2.msra.mxu0 0.0
  %1543 = vmatprep.subr.mxu0 0.0
  %1544 = vmatpush2.msra.mxu0 0.0
  %1545 = vmatprep.subr.mxu0 0.0
  %1546 = vmatpush2.msra.mxu0 0.0
  %1547 = vmatprep.subr.mxu0 0.0
  %1548 = vmatpush2.msra.mxu0 0.0
  %1549 = vmatprep.subr.mxu0 0.0
  %1550 = vmatpush2.msra.mxu0 0.0
  %1551 = vmatprep.subr.mxu0 0.0
  %1552 = vmatpush2.msra.mxu0 0.0
  %1553 = vmatprep.subr.mxu0 0.0
  %1554 = vmatpush2.msra.mxu0 0.0
  %1555 = vmatprep.subr.mxu0 0.0
  %1556 = vmatpush2.msra.mxu0 0.0
  %1557 = vmatprep.subr.mxu0 0.0
  %1558 = vmatpush2.msra.mxu0 0.0
  %1559 = vmatprep.subr.mxu0 0.0
  %1560 = vmatpush2.msra.mxu0 0.0
  %1561 = vmatprep.subr.mxu0 0.0
  %1562 = vmatpush2.msra.mxu0 0.0
  %1563 = vmatprep.subr.mxu0 0.0
  %1564 = vmatpush2.msra.mxu0 0.0
  %1565 = vmatprep.subr.mxu0 0.0
  %1566 = vmatpush2.msra.mxu0 0.0
  %1567 = vmatprep.subr.mxu0 0.0
  %1568 = vmatpush2.msra.mxu0 0.0
  %1569 = vmatprep.mubr.f32.mxu0 0.0
  %1570 = vmatmul.mubr.f32.gmra.mxu0 %v1503
  %v1571 = vpop.f32.mrf.mxu0
  %v1572 = vadd.f32 0.0, %v1571
  %v1573 = vpop.f32.mrf.mxu0
  %1574 = vdwg.mxu0
  %1576 = vrot.lane.b32.xlu0 %v1499, 32
  %v1577 = vpop.permute.xlu0 %1576
  %v1578 = vsel %vm40, %v1577, 0
  %1580 = vmatprep.subr.mxu0 0.0
  %1581 = vmatpush1.msra.mxu0 0.0
  %1582 = vmatprep.subr.mxu0 0.0
  %1583 = vmatpush1.msra.mxu0 0.0
  %1584 = vmatprep.subr.mxu0 0.0
  %1585 = vmatpush1.msra.mxu0 0.0
  %1586 = vmatprep.subr.mxu0 0.0
  %1587 = vmatpush1.msra.mxu0 0.0
  %1588 = vmatprep.subr.mxu0 0.0
  %1589 = vmatpush1.msra.mxu0 0.0
  %1590 = vmatprep.subr.mxu0 0.0
  %1591 = vmatpush1.msra.mxu0 0.0
  %1592 = vmatprep.subr.mxu0 0.0
  %1593 = vmatpush1.msra.mxu0 0.0
  %1594 = vmatprep.subr.mxu0 0.0
  %1595 = vmatpush1.msra.mxu0 0.0
  %1596 = vmatprep.subr.mxu0 0.0
  %1597 = vmatpush1.msra.mxu0 0.0
  %1598 = vmatprep.subr.mxu0 0.0
  %1599 = vmatpush1.msra.mxu0 0.0
  %1600 = vmatprep.subr.mxu0 0.0
  %1601 = vmatpush1.msra.mxu0 0.0
  %1602 = vmatprep.subr.mxu0 0.0
  %1603 = vmatpush1.msra.mxu0 0.0
  %1604 = vmatprep.subr.mxu0 0.0
  %1605 = vmatpush1.msra.mxu0 %v37
  %1606 = vmatprep.subr.mxu0 0.0
  %1607 = vmatpush1.msra.mxu0 %v36
  %1608 = vmatprep.subr.mxu0 0.0
  %1609 = vmatpush1.msra.mxu0 %v35
  %1610 = vmatprep.subr.mxu0 0.0
  %1611 = vmatpush1.msra.mxu0 %v34
  %1612 = vmatprep.subr.mxu0 0.0
  %1613 = vmatpush2.msra.mxu0 0.0
  %1614 = vmatprep.subr.mxu0 0.0
  %1615 = vmatpush2.msra.mxu0 0.0
  %1616 = vmatprep.subr.mxu0 0.0
  %1617 = vmatpush2.msra.mxu0 0.0
  %1618 = vmatprep.subr.mxu0 0.0
  %1619 = vmatpush2.msra.mxu0 0.0
  %1620 = vmatprep.subr.mxu0 0.0
  %1621 = vmatpush2.msra.mxu0 0.0
  %1622 = vmatprep.subr.mxu0 0.0
  %1623 = vmatpush2.msra.mxu0 0.0
  %1624 = vmatprep.subr.mxu0 0.0
  %1625 = vmatpush2.msra.mxu0 0.0
  %1626 = vmatprep.subr.mxu0 0.0
  %1627 = vmatpush2.msra.mxu0 0.0
  %1628 = vmatprep.subr.mxu0 0.0
  %1629 = vmatpush2.msra.mxu0 0.0
  %1630 = vmatprep.subr.mxu0 0.0
  %1631 = vmatpush2.msra.mxu0 0.0
  %1632 = vmatprep.subr.mxu0 0.0
  %1633 = vmatpush2.msra.mxu0 0.0
  %1634 = vmatprep.subr.mxu0 0.0
  %1635 = vmatpush2.msra.mxu0 0.0
  %1636 = vmatprep.subr.mxu0 0.0
  %1637 = vmatpush2.msra.mxu0 0.0
  %1638 = vmatprep.subr.mxu0 0.0
  %1639 = vmatpush2.msra.mxu0 0.0
  %1640 = vmatprep.subr.mxu0 0.0
  %1641 = vmatpush2.msra.mxu0 0.0
  %1642 = vmatprep.subr.mxu0 0.0
  %1643 = vmatpush2.msra.mxu0 0.0
  %1644 = vmatprep.mubr.f32.mxu0 0.0
  %1645 = vmatmul.mubr.f32.gmra.mxu0 %v1578
  %v1646 = vpop.f32.mrf.mxu0
  %v1647 = vadd.f32 %v1572, %v1646
  %v1648 = vpop.f32.mrf.mxu0
  %1649 = vdwg.mxu0
  %v1650 = vadd.f32 %v1647, %v288
  %v1651 = vxor.u32 %v1650, 2147483648
  %v1652 = vmul.f32 %v1651, 1.442695
  %v1653 = vpow.pop %v1652
  %v1654 = vadd.f32 %v1653, 1.0
  %v1655 = vrcp.pop %v1654
  %v1656 = vmul.f32 1.0, %v1655
  %v1657 = vtanh.pop %v1650
  %v1658 = vmul.f32 %v1656, %v1396
  %1660 = vrot.lane.b32.xlu0 %v1657, 64
  %v1661 = vpop.permute.xlu0 %1660
  %v1663 = vmul.f32 %v1656, %v1661
  %1665 = vrot.lane.b32.xlu0 %v1663, 32
  %v1666 = vpop.permute.xlu0 %1665
  %v1668 = vadd.f32 %v1658, %v1666
  %v1669 = vtanh.pop %v1668
  %1671 = vrot.lane.b32.xlu0 %v1669, 64
  %v1672 = vpop.permute.xlu0 %1671
  %v1674 = vmul.f32 %v1656, %v1672
  %s1675 = scalar_lea.vmem %s0, 48
  %v1676 = vld [vmem:[%s1675] sm:$0xff]
  %1677 = vmatprep.subr.mxu0 0.0
  %1678 = vmatpush1.msra.mxu0 0.0
  %1679 = vmatprep.subr.mxu0 0.0
  %1680 = vmatpush1.msra.mxu0 0.0
  %1681 = vmatprep.subr.mxu0 0.0
  %1682 = vmatpush1.msra.mxu0 0.0
  %1683 = vmatprep.subr.mxu0 0.0
  %1684 = vmatpush1.msra.mxu0 0.0
  %1685 = vmatprep.subr.mxu0 0.0
  %1686 = vmatpush1.msra.mxu0 0.0
  %1687 = vmatprep.subr.mxu0 0.0
  %1688 = vmatpush1.msra.mxu0 0.0
  %1689 = vmatprep.subr.mxu0 0.0
  %1690 = vmatpush1.msra.mxu0 0.0
  %1691 = vmatprep.subr.mxu0 0.0
  %1692 = vmatpush1.msra.mxu0 0.0
  %1693 = vmatprep.subr.mxu0 0.0
  %1694 = vmatpush1.msra.mxu0 0.0
  %1695 = vmatprep.subr.mxu0 0.0
  %1696 = vmatpush1.msra.mxu0 0.0
  %1697 = vmatprep.subr.mxu0 0.0
  %1698 = vmatpush1.msra.mxu0 0.0
  %1699 = vmatprep.subr.mxu0 0.0
  %1700 = vmatpush1.msra.mxu0 0.0
  %1701 = vmatprep.subr.mxu0 0.0
  %1702 = vmatpush1.msra.mxu0 %v28
  %1703 = vmatprep.subr.mxu0 0.0
  %1704 = vmatpush1.msra.mxu0 %v27
  %1705 = vmatprep.subr.mxu0 0.0
  %1706 = vmatpush1.msra.mxu0 %v26
  %1707 = vmatprep.subr.mxu0 0.0
  %1708 = vmatpush1.msra.mxu0 %v25
  %1709 = vmatprep.subr.mxu0 0.0
  %1710 = vmatpush2.msra.mxu0 0.0
  %1711 = vmatprep.subr.mxu0 0.0
  %1712 = vmatpush2.msra.mxu0 0.0
  %1713 = vmatprep.subr.mxu0 0.0
  %1714 = vmatpush2.msra.mxu0 0.0
  %1715 = vmatprep.subr.mxu0 0.0
  %1716 = vmatpush2.msra.mxu0 0.0
  %1717 = vmatprep.subr.mxu0 0.0
  %1718 = vmatpush2.msra.mxu0 0.0
  %1719 = vmatprep.subr.mxu0 0.0
  %1720 = vmatpush2.msra.mxu0 0.0
  %1721 = vmatprep.subr.mxu0 0.0
  %1722 = vmatpush2.msra.mxu0 0.0
  %1723 = vmatprep.subr.mxu0 0.0
  %1724 = vmatpush2.msra.mxu0 0.0
  %1725 = vmatprep.subr.mxu0 0.0
  %1726 = vmatpush2.msra.mxu0 0.0
  %1727 = vmatprep.subr.mxu0 0.0
  %1728 = vmatpush2.msra.mxu0 0.0
  %1729 = vmatprep.subr.mxu0 0.0
  %1730 = vmatpush2.msra.mxu0 0.0
  %1731 = vmatprep.subr.mxu0 0.0
  %1732 = vmatpush2.msra.mxu0 0.0
  %1733 = vmatprep.subr.mxu0 0.0
  %1734 = vmatpush2.msra.mxu0 0.0
  %1735 = vmatprep.subr.mxu0 0.0
  %1736 = vmatpush2.msra.mxu0 0.0
  %1737 = vmatprep.subr.mxu0 0.0
  %1738 = vmatpush2.msra.mxu0 0.0
  %1739 = vmatprep.subr.mxu0 0.0
  %1740 = vmatpush2.msra.mxu0 0.0
  %1741 = vmatprep.mubr.f32.mxu0 0.0
  %1742 = vmatmul.mubr.f32.gmra.mxu0 %v1578
  %v1743 = vpop.f32.mrf.mxu0
  %v1744 = vadd.f32 0.0, %v1743
  %v1745 = vpop.f32.mrf.mxu0
  %1746 = vdwg.mxu0
  %v1747 = vadd.f32 %v1676, %v1744
  %v1748 = vxor.u32 %v1747, 2147483648
  %v1749 = vmul.f32 %v1748, 1.442695
  %v1750 = vpow.pop %v1749
  %v1751 = vadd.f32 %v1750, 1.0
  %v1752 = vrcp.pop %v1751
  %v1753 = vmul.f32 1.0, %v1752
  %v1754 = vtanh.pop %v1747
  %v1755 = vmul.f32 %v1753, %v1493
  %1757 = vrot.lane.b32.xlu0 %v1754, 64
  %v1758 = vpop.permute.xlu0 %1757
  %v1760 = vmul.f32 %v1753, %v1758
  %1762 = vrot.lane.b32.xlu0 %v1760, 32
  %v1763 = vpop.permute.xlu0 %1762
  %v1765 = vadd.f32 %v1755, %v1763
  %v1766 = vtanh.pop %v1765
  %1768 = vrot.lane.b32.xlu0 %v1766, 64
  %v1769 = vpop.permute.xlu0 %1768
  %v1771 = vmul.f32 %v1753, %v1769
  %1773 = vrot.lane.b32.xlu0 %v1674, 32
  %v1774 = vpop.permute.xlu0 %1773
  %v1775 = vsel %vm40, %v1774, 0
  %1777 = vmatprep.subr.mxu0 0.0
  %1778 = vmatpush1.msra.mxu0 0.0
  %1779 = vmatprep.subr.mxu0 0.0
  %1780 = vmatpush1.msra.mxu0 0.0
  %1781 = vmatprep.subr.mxu0 0.0
  %1782 = vmatpush1.msra.mxu0 0.0
  %1783 = vmatprep.subr.mxu0 0.0
  %1784 = vmatpush1.msra.mxu0 0.0
  %1785 = vmatprep.subr.mxu0 0.0
  %1786 = vmatpush1.msra.mxu0 0.0
  %1787 = vmatprep.subr.mxu0 0.0
  %1788 = vmatpush1.msra.mxu0 0.0
  %1789 = vmatprep.subr.mxu0 0.0
  %1790 = vmatpush1.msra.mxu0 0.0
  %1791 = vmatprep.subr.mxu0 0.0
  %1792 = vmatpush1.msra.mxu0 0.0
  %1793 = vmatprep.subr.mxu0 0.0
  %1794 = vmatpush1.msra.mxu0 0.0
  %1795 = vmatprep.subr.mxu0 0.0
  %1796 = vmatpush1.msra.mxu0 0.0
  %1797 = vmatprep.subr.mxu0 0.0
  %1798 = vmatpush1.msra.mxu0 0.0
  %1799 = vmatprep.subr.mxu0 0.0
  %1800 = vmatpush1.msra.mxu0 0.0
  %1801 = vmatprep.subr.mxu0 0.0
  %1802 = vmatpush1.msra.mxu0 %v33
  %1803 = vmatprep.subr.mxu0 0.0
  %1804 = vmatpush1.msra.mxu0 %v32
  %1805 = vmatprep.subr.mxu0 0.0
  %1806 = vmatpush1.msra.mxu0 %v31
  %1807 = vmatprep.subr.mxu0 0.0
  %1808 = vmatpush1.msra.mxu0 %v30
  %1809 = vmatprep.subr.mxu0 0.0
  %1810 = vmatpush2.msra.mxu0 0.0
  %1811 = vmatprep.subr.mxu0 0.0
  %1812 = vmatpush2.msra.mxu0 0.0
  %1813 = vmatprep.subr.mxu0 0.0
  %1814 = vmatpush2.msra.mxu0 0.0
  %1815 = vmatprep.subr.mxu0 0.0
  %1816 = vmatpush2.msra.mxu0 0.0
  %1817 = vmatprep.subr.mxu0 0.0
  %1818 = vmatpush2.msra.mxu0 0.0
  %1819 = vmatprep.subr.mxu0 0.0
  %1820 = vmatpush2.msra.mxu0 0.0
  %1821 = vmatprep.subr.mxu0 0.0
  %1822 = vmatpush2.msra.mxu0 0.0
  %1823 = vmatprep.subr.mxu0 0.0
  %1824 = vmatpush2.msra.mxu0 0.0
  %1825 = vmatprep.subr.mxu0 0.0
  %1826 = vmatpush2.msra.mxu0 0.0
  %1827 = vmatprep.subr.mxu0 0.0
  %1828 = vmatpush2.msra.mxu0 0.0
  %1829 = vmatprep.subr.mxu0 0.0
  %1830 = vmatpush2.msra.mxu0 0.0
  %1831 = vmatprep.subr.mxu0 0.0
  %1832 = vmatpush2.msra.mxu0 0.0
  %1833 = vmatprep.subr.mxu0 0.0
  %1834 = vmatpush2.msra.mxu0 0.0
  %1835 = vmatprep.subr.mxu0 0.0
  %1836 = vmatpush2.msra.mxu0 0.0
  %1837 = vmatprep.subr.mxu0 0.0
  %1838 = vmatpush2.msra.mxu0 0.0
  %1839 = vmatprep.subr.mxu0 0.0
  %1840 = vmatpush2.msra.mxu0 0.0
  %1841 = vmatprep.mubr.f32.mxu0 0.0
  %1842 = vmatmul.mubr.f32.gmra.mxu0 %v1775
  %v1843 = vpop.f32.mrf.mxu0
  %v1844 = vadd.f32 0.0, %v1843
  %v1845 = vpop.f32.mrf.mxu0
  %1846 = vdwg.mxu0
  %1848 = vrot.lane.b32.xlu0 %v1771, 32
  %v1849 = vpop.permute.xlu0 %1848
  %v1850 = vsel %vm40, %v1849, 0
  %1852 = vmatprep.subr.mxu0 0.0
  %1853 = vmatpush1.msra.mxu0 0.0
  %1854 = vmatprep.subr.mxu0 0.0
  %1855 = vmatpush1.msra.mxu0 0.0
  %1856 = vmatprep.subr.mxu0 0.0
  %1857 = vmatpush1.msra.mxu0 0.0
  %1858 = vmatprep.subr.mxu0 0.0
  %1859 = vmatpush1.msra.mxu0 0.0
  %1860 = vmatprep.subr.mxu0 0.0
  %1861 = vmatpush1.msra.mxu0 0.0
  %1862 = vmatprep.subr.mxu0 0.0
  %1863 = vmatpush1.msra.mxu0 0.0
  %1864 = vmatprep.subr.mxu0 0.0
  %1865 = vmatpush1.msra.mxu0 0.0
  %1866 = vmatprep.subr.mxu0 0.0
  %1867 = vmatpush1.msra.mxu0 0.0
  %1868 = vmatprep.subr.mxu0 0.0
  %1869 = vmatpush1.msra.mxu0 0.0
  %1870 = vmatprep.subr.mxu0 0.0
  %1871 = vmatpush1.msra.mxu0 0.0
  %1872 = vmatprep.subr.mxu0 0.0
  %1873 = vmatpush1.msra.mxu0 0.0
  %1874 = vmatprep.subr.mxu0 0.0
  %1875 = vmatpush1.msra.mxu0 0.0
  %1876 = vmatprep.subr.mxu0 0.0
  %1877 = vmatpush1.msra.mxu0 %v37
  %1878 = vmatprep.subr.mxu0 0.0
  %1879 = vmatpush1.msra.mxu0 %v36
  %1880 = vmatprep.subr.mxu0 0.0
  %1881 = vmatpush1.msra.mxu0 %v35
  %1882 = vmatprep.subr.mxu0 0.0
  %1883 = vmatpush1.msra.mxu0 %v34
  %1884 = vmatprep.subr.mxu0 0.0
  %1885 = vmatpush2.msra.mxu0 0.0
  %1886 = vmatprep.subr.mxu0 0.0
  %1887 = vmatpush2.msra.mxu0 0.0
  %1888 = vmatprep.subr.mxu0 0.0
  %1889 = vmatpush2.msra.mxu0 0.0
  %1890 = vmatprep.subr.mxu0 0.0
  %1891 = vmatpush2.msra.mxu0 0.0
  %1892 = vmatprep.subr.mxu0 0.0
  %1893 = vmatpush2.msra.mxu0 0.0
  %1894 = vmatprep.subr.mxu0 0.0
  %1895 = vmatpush2.msra.mxu0 0.0
  %1896 = vmatprep.subr.mxu0 0.0
  %1897 = vmatpush2.msra.mxu0 0.0
  %1898 = vmatprep.subr.mxu0 0.0
  %1899 = vmatpush2.msra.mxu0 0.0
  %1900 = vmatprep.subr.mxu0 0.0
  %1901 = vmatpush2.msra.mxu0 0.0
  %1902 = vmatprep.subr.mxu0 0.0
  %1903 = vmatpush2.msra.mxu0 0.0
  %1904 = vmatprep.subr.mxu0 0.0
  %1905 = vmatpush2.msra.mxu0 0.0
  %1906 = vmatprep.subr.mxu0 0.0
  %1907 = vmatpush2.msra.mxu0 0.0
  %1908 = vmatprep.subr.mxu0 0.0
  %1909 = vmatpush2.msra.mxu0 0.0
  %1910 = vmatprep.subr.mxu0 0.0
  %1911 = vmatpush2.msra.mxu0 0.0
  %1912 = vmatprep.subr.mxu0 0.0
  %1913 = vmatpush2.msra.mxu0 0.0
  %1914 = vmatprep.subr.mxu0 0.0
  %1915 = vmatpush2.msra.mxu0 0.0
  %1916 = vmatprep.mubr.f32.mxu0 0.0
  %1917 = vmatmul.mubr.f32.gmra.mxu0 %v1850
  %v1918 = vpop.f32.mrf.mxu0
  %v1919 = vadd.f32 %v1844, %v1918
  %v1920 = vpop.f32.mrf.mxu0
  %1921 = vdwg.mxu0
  %v1922 = vadd.f32 %v1919, %v288
  %v1923 = vxor.u32 %v1922, 2147483648
  %v1924 = vmul.f32 %v1923, 1.442695
  %v1925 = vpow.pop %v1924
  %v1926 = vadd.f32 %v1925, 1.0
  %v1927 = vrcp.pop %v1926
  %v1928 = vmul.f32 1.0, %v1927
  %v1929 = vtanh.pop %v1922
  %v1930 = vmul.f32 %v1928, %v1668
  %1932 = vrot.lane.b32.xlu0 %v1929, 64
  %v1933 = vpop.permute.xlu0 %1932
  %v1935 = vmul.f32 %v1928, %v1933
  %1937 = vrot.lane.b32.xlu0 %v1935, 32
  %v1938 = vpop.permute.xlu0 %1937
  %v1940 = vadd.f32 %v1930, %v1938
  %v1941 = vtanh.pop %v1940
  %1943 = vrot.lane.b32.xlu0 %v1941, 64
  %v1944 = vpop.permute.xlu0 %1943
  %v1946 = vmul.f32 %v1928, %v1944
  %s1947 = scalar_lea.vmem %s0, 56
  %v1948 = vld [vmem:[%s1947] sm:$0xff]
  %1949 = vmatprep.subr.mxu0 0.0
  %1950 = vmatpush1.msra.mxu0 0.0
  %1951 = vmatprep.subr.mxu0 0.0
  %1952 = vmatpush1.msra.mxu0 0.0
  %1953 = vmatprep.subr.mxu0 0.0
  %1954 = vmatpush1.msra.mxu0 0.0
  %1955 = vmatprep.subr.mxu0 0.0
  %1956 = vmatpush1.msra.mxu0 0.0
  %1957 = vmatprep.subr.mxu0 0.0
  %1958 = vmatpush1.msra.mxu0 0.0
  %1959 = vmatprep.subr.mxu0 0.0
  %1960 = vmatpush1.msra.mxu0 0.0
  %1961 = vmatprep.subr.mxu0 0.0
  %1962 = vmatpush1.msra.mxu0 0.0
  %1963 = vmatprep.subr.mxu0 0.0
  %1964 = vmatpush1.msra.mxu0 0.0
  %1965 = vmatprep.subr.mxu0 0.0
  %1966 = vmatpush1.msra.mxu0 0.0
  %1967 = vmatprep.subr.mxu0 0.0
  %1968 = vmatpush1.msra.mxu0 0.0
  %1969 = vmatprep.subr.mxu0 0.0
  %1970 = vmatpush1.msra.mxu0 0.0
  %1971 = vmatprep.subr.mxu0 0.0
  %1972 = vmatpush1.msra.mxu0 0.0
  %1973 = vmatprep.subr.mxu0 0.0
  %1974 = vmatpush1.msra.mxu0 %v28
  %1975 = vmatprep.subr.mxu0 0.0
  %1976 = vmatpush1.msra.mxu0 %v27
  %1977 = vmatprep.subr.mxu0 0.0
  %1978 = vmatpush1.msra.mxu0 %v26
  %1979 = vmatprep.subr.mxu0 0.0
  %1980 = vmatpush1.msra.mxu0 %v25
  %1981 = vmatprep.subr.mxu0 0.0
  %1982 = vmatpush2.msra.mxu0 0.0
  %1983 = vmatprep.subr.mxu0 0.0
  %1984 = vmatpush2.msra.mxu0 0.0
  %1985 = vmatprep.subr.mxu0 0.0
  %1986 = vmatpush2.msra.mxu0 0.0
  %1987 = vmatprep.subr.mxu0 0.0
  %1988 = vmatpush2.msra.mxu0 0.0
  %1989 = vmatprep.subr.mxu0 0.0
  %1990 = vmatpush2.msra.mxu0 0.0
  %1991 = vmatprep.subr.mxu0 0.0
  %1992 = vmatpush2.msra.mxu0 0.0
  %1993 = vmatprep.subr.mxu0 0.0
  %1994 = vmatpush2.msra.mxu0 0.0
  %1995 = vmatprep.subr.mxu0 0.0
  %1996 = vmatpush2.msra.mxu0 0.0
  %1997 = vmatprep.subr.mxu0 0.0
  %1998 = vmatpush2.msra.mxu0 0.0
  %1999 = vmatprep.subr.mxu0 0.0
  %2000 = vmatpush2.msra.mxu0 0.0
  %2001 = vmatprep.subr.mxu0 0.0
  %2002 = vmatpush2.msra.mxu0 0.0
  %2003 = vmatprep.subr.mxu0 0.0
  %2004 = vmatpush2.msra.mxu0 0.0
  %2005 = vmatprep.subr.mxu0 0.0
  %2006 = vmatpush2.msra.mxu0 0.0
  %2007 = vmatprep.subr.mxu0 0.0
  %2008 = vmatpush2.msra.mxu0 0.0
  %2009 = vmatprep.subr.mxu0 0.0
  %2010 = vmatpush2.msra.mxu0 0.0
  %2011 = vmatprep.subr.mxu0 0.0
  %2012 = vmatpush2.msra.mxu0 0.0
  %2013 = vmatprep.mubr.f32.mxu0 0.0
  %2014 = vmatmul.mubr.f32.gmra.mxu0 %v1850
  %v2015 = vpop.f32.mrf.mxu0
  %v2016 = vadd.f32 0.0, %v2015
  %v2017 = vpop.f32.mrf.mxu0
  %2018 = vdwg.mxu0
  %v2019 = vadd.f32 %v1948, %v2016
  %v2020 = vxor.u32 %v2019, 2147483648
  %v2021 = vmul.f32 %v2020, 1.442695
  %v2022 = vpow.pop %v2021
  %v2023 = vadd.f32 %v2022, 1.0
  %v2024 = vrcp.pop %v2023
  %v2025 = vmul.f32 1.0, %v2024
  %v2026 = vtanh.pop %v2019
  %v2027 = vmul.f32 %v2025, %v1765
  %2029 = vrot.lane.b32.xlu0 %v2026, 64
  %v2030 = vpop.permute.xlu0 %2029
  %v2032 = vmul.f32 %v2025, %v2030
  %2034 = vrot.lane.b32.xlu0 %v2032, 32
  %v2035 = vpop.permute.xlu0 %2034
  %v2037 = vadd.f32 %v2027, %v2035
  %v2038 = vtanh.pop %v2037
  %2040 = vrot.lane.b32.xlu0 %v2038, 64
  %v2041 = vpop.permute.xlu0 %2040
  %v2043 = vmul.f32 %v2025, %v2041
  %2045 = vrot.lane.b32.xlu0 %v1946, 32
  %v2046 = vpop.permute.xlu0 %2045
  %v2047 = vsel %vm40, %v2046, 0
  %2049 = vmatprep.subr.mxu0 0.0
  %2050 = vmatpush1.msra.mxu0 0.0
  %2051 = vmatprep.subr.mxu0 0.0
  %2052 = vmatpush1.msra.mxu0 0.0
  %2053 = vmatprep.subr.mxu0 0.0
  %2054 = vmatpush1.msra.mxu0 0.0
  %2055 = vmatprep.subr.mxu0 0.0
  %2056 = vmatpush1.msra.mxu0 0.0
  %2057 = vmatprep.subr.mxu0 0.0
  %2058 = vmatpush1.msra.mxu0 0.0
  %2059 = vmatprep.subr.mxu0 0.0
  %2060 = vmatpush1.msra.mxu0 0.0
  %2061 = vmatprep.subr.mxu0 0.0
  %2062 = vmatpush1.msra.mxu0 0.0
  %2063 = vmatprep.subr.mxu0 0.0
  %2064 = vmatpush1.msra.mxu0 0.0
  %2065 = vmatprep.subr.mxu0 0.0
  %2066 = vmatpush1.msra.mxu0 0.0
  %2067 = vmatprep.subr.mxu0 0.0
  %2068 = vmatpush1.msra.mxu0 0.0
  %2069 = vmatprep.subr.mxu0 0.0
  %2070 = vmatpush1.msra.mxu0 0.0
  %2071 = vmatprep.subr.mxu0 0.0
  %2072 = vmatpush1.msra.mxu0 0.0
  %2073 = vmatprep.subr.mxu0 0.0
  %2074 = vmatpush1.msra.mxu0 %v33
  %2075 = vmatprep.subr.mxu0 0.0
  %2076 = vmatpush1.msra.mxu0 %v32
  %2077 = vmatprep.subr.mxu0 0.0
  %2078 = vmatpush1.msra.mxu0 %v31
  %2079 = vmatprep.subr.mxu0 0.0
  %2080 = vmatpush1.msra.mxu0 %v30
  %2081 = vmatprep.subr.mxu0 0.0
  %2082 = vmatpush2.msra.mxu0 0.0
  %2083 = vmatprep.subr.mxu0 0.0
  %2084 = vmatpush2.msra.mxu0 0.0
  %2085 = vmatprep.subr.mxu0 0.0
  %2086 = vmatpush2.msra.mxu0 0.0
  %2087 = vmatprep.subr.mxu0 0.0
  %2088 = vmatpush2.msra.mxu0 0.0
  %2089 = vmatprep.subr.mxu0 0.0
  %2090 = vmatpush2.msra.mxu0 0.0
  %2091 = vmatprep.subr.mxu0 0.0
  %2092 = vmatpush2.msra.mxu0 0.0
  %2093 = vmatprep.subr.mxu0 0.0
  %2094 = vmatpush2.msra.mxu0 0.0
  %2095 = vmatprep.subr.mxu0 0.0
  %2096 = vmatpush2.msra.mxu0 0.0
  %2097 = vmatprep.subr.mxu0 0.0
  %2098 = vmatpush2.msra.mxu0 0.0
  %2099 = vmatprep.subr.mxu0 0.0
  %2100 = vmatpush2.msra.mxu0 0.0
  %2101 = vmatprep.subr.mxu0 0.0
  %2102 = vmatpush2.msra.mxu0 0.0
  %2103 = vmatprep.subr.mxu0 0.0
  %2104 = vmatpush2.msra.mxu0 0.0
  %2105 = vmatprep.subr.mxu0 0.0
  %2106 = vmatpush2.msra.mxu0 0.0
  %2107 = vmatprep.subr.mxu0 0.0
  %2108 = vmatpush2.msra.mxu0 0.0
  %2109 = vmatprep.subr.mxu0 0.0
  %2110 = vmatpush2.msra.mxu0 0.0
  %2111 = vmatprep.subr.mxu0 0.0
  %2112 = vmatpush2.msra.mxu0 0.0
  %2113 = vmatprep.mubr.f32.mxu0 0.0
  %2114 = vmatmul.mubr.f32.gmra.mxu0 %v2047
  %v2115 = vpop.f32.mrf.mxu0
  %v2116 = vadd.f32 0.0, %v2115
  %v2117 = vpop.f32.mrf.mxu0
  %2118 = vdwg.mxu0
  %2120 = vrot.lane.b32.xlu0 %v2043, 32
  %v2121 = vpop.permute.xlu0 %2120
  %v2122 = vsel %vm40, %v2121, 0
  %2124 = vmatprep.subr.mxu0 0.0
  %2125 = vmatpush1.msra.mxu0 0.0
  %2126 = vmatprep.subr.mxu0 0.0
  %2127 = vmatpush1.msra.mxu0 0.0
  %2128 = vmatprep.subr.mxu0 0.0
  %2129 = vmatpush1.msra.mxu0 0.0
  %2130 = vmatprep.subr.mxu0 0.0
  %2131 = vmatpush1.msra.mxu0 0.0
  %2132 = vmatprep.subr.mxu0 0.0
  %2133 = vmatpush1.msra.mxu0 0.0
  %2134 = vmatprep.subr.mxu0 0.0
  %2135 = vmatpush1.msra.mxu0 0.0
  %2136 = vmatprep.subr.mxu0 0.0
  %2137 = vmatpush1.msra.mxu0 0.0
  %2138 = vmatprep.subr.mxu0 0.0
  %2139 = vmatpush1.msra.mxu0 0.0
  %2140 = vmatprep.subr.mxu0 0.0
  %2141 = vmatpush1.msra.mxu0 0.0
  %2142 = vmatprep.subr.mxu0 0.0
  %2143 = vmatpush1.msra.mxu0 0.0
  %2144 = vmatprep.subr.mxu0 0.0
  %2145 = vmatpush1.msra.mxu0 0.0
  %2146 = vmatprep.subr.mxu0 0.0
  %2147 = vmatpush1.msra.mxu0 0.0
  %2148 = vmatprep.subr.mxu0 0.0
  %2149 = vmatpush1.msra.mxu0 %v37
  %2150 = vmatprep.subr.mxu0 0.0
  %2151 = vmatpush1.msra.mxu0 %v36
  %2152 = vmatprep.subr.mxu0 0.0
  %2153 = vmatpush1.msra.mxu0 %v35
  %2154 = vmatprep.subr.mxu0 0.0
  %2155 = vmatpush1.msra.mxu0 %v34
  %2156 = vmatprep.subr.mxu0 0.0
  %2157 = vmatpush2.msra.mxu0 0.0
  %2158 = vmatprep.subr.mxu0 0.0
  %2159 = vmatpush2.msra.mxu0 0.0
  %2160 = vmatprep.subr.mxu0 0.0
  %2161 = vmatpush2.msra.mxu0 0.0
  %2162 = vmatprep.subr.mxu0 0.0
  %2163 = vmatpush2.msra.mxu0 0.0
  %2164 = vmatprep.subr.mxu0 0.0
  %2165 = vmatpush2.msra.mxu0 0.0
  %2166 = vmatprep.subr.mxu0 0.0
  %2167 = vmatpush2.msra.mxu0 0.0
  %2168 = vmatprep.subr.mxu0 0.0
  %2169 = vmatpush2.msra.mxu0 0.0
  %2170 = vmatprep.subr.mxu0 0.0
  %2171 = vmatpush2.msra.mxu0 0.0
  %2172 = vmatprep.subr.mxu0 0.0
  %2173 = vmatpush2.msra.mxu0 0.0
  %2174 = vmatprep.subr.mxu0 0.0
  %2175 = vmatpush2.msra.mxu0 0.0
  %2176 = vmatprep.subr.mxu0 0.0
  %2177 = vmatpush2.msra.mxu0 0.0
  %2178 = vmatprep.subr.mxu0 0.0
  %2179 = vmatpush2.msra.mxu0 0.0
  %2180 = vmatprep.subr.mxu0 0.0
  %2181 = vmatpush2.msra.mxu0 0.0
  %2182 = vmatprep.subr.mxu0 0.0
  %2183 = vmatpush2.msra.mxu0 0.0
  %2184 = vmatprep.subr.mxu0 0.0
  %2185 = vmatpush2.msra.mxu0 0.0
  %2186 = vmatprep.subr.mxu0 0.0
  %2187 = vmatpush2.msra.mxu0 0.0
  %2188 = vmatprep.mubr.f32.mxu0 0.0
  %2189 = vmatmul.mubr.f32.gmra.mxu0 %v2122
  %v2190 = vpop.f32.mrf.mxu0
  %v2191 = vadd.f32 %v2116, %v2190
  %v2192 = vpop.f32.mrf.mxu0
  %2193 = vdwg.mxu0
  %v2194 = vadd.f32 %v2191, %v288
  %v2195 = vxor.u32 %v2194, 2147483648
  %v2196 = vmul.f32 %v2195, 1.442695
  %v2197 = vpow.pop %v2196
  %v2198 = vadd.f32 %v2197, 1.0
  %v2199 = vrcp.pop %v2198
  %v2200 = vmul.f32 1.0, %v2199
  %v2201 = vtanh.pop %v2194
  %v2202 = vmul.f32 %v2200, %v1940
  %2204 = vrot.lane.b32.xlu0 %v2201, 64
  %v2205 = vpop.permute.xlu0 %2204
  %v2207 = vmul.f32 %v2200, %v2205
  %2209 = vrot.lane.b32.xlu0 %v2207, 32
  %v2210 = vpop.permute.xlu0 %2209
  %v2212 = vadd.f32 %v2202, %v2210
  %v2213 = vtanh.pop %v2212
  %2215 = vrot.lane.b32.xlu0 %v2213, 64
  %v2216 = vpop.permute.xlu0 %2215
  %v2218 = vmul.f32 %v2200, %v2216
  %v2219 = vld [vmem:[%s4] sm:$0xff]
  %v2220 = vld [vmem:[%s4 + $0x8] sm:$0xff]
  %v2221 = vld [vmem:[%s4 + $0x10] sm:$0xff]
  %v2222 = vld [vmem:[%s4 + $0x18] sm:$0xff]
  %v2223 = vld [vmem:[#allocation2] sm:$0x1]
  %v2225 = vlaneseq
  %v2226 = vshrl.u32 %v2225, 7
  %v2227 = vsub.s32 0, %v2226
  %v2228 = vrot.slane %v2223, %v2227
  %2231 = vrot.lane.b32.xlu0 %v2218, 32
  %v2232 = vpop.permute.xlu0 %2231
  %v2233 = vsel %vm40, %v2232, 0
  %2235 = vmatprep.subr.mxu0 0.0
  %2236 = vmatpush1.msra.mxu0 0.0
  %2237 = vmatprep.subr.mxu0 0.0
  %2238 = vmatpush1.msra.mxu0 0.0
  %2239 = vmatprep.subr.mxu0 0.0
  %2240 = vmatpush1.msra.mxu0 0.0
  %2241 = vmatprep.subr.mxu0 0.0
  %2242 = vmatpush1.msra.mxu0 0.0
  %2243 = vmatprep.subr.mxu0 0.0
  %2244 = vmatpush1.msra.mxu0 0.0
  %2245 = vmatprep.subr.mxu0 0.0
  %2246 = vmatpush1.msra.mxu0 0.0
  %2247 = vmatprep.subr.mxu0 0.0
  %2248 = vmatpush1.msra.mxu0 0.0
  %2249 = vmatprep.subr.mxu0 0.0
  %2250 = vmatpush1.msra.mxu0 0.0
  %2251 = vmatprep.subr.mxu0 0.0
  %2252 = vmatpush1.msra.mxu0 0.0
  %2253 = vmatprep.subr.mxu0 0.0
  %2254 = vmatpush1.msra.mxu0 0.0
  %2255 = vmatprep.subr.mxu0 0.0
  %2256 = vmatpush1.msra.mxu0 0.0
  %2257 = vmatprep.subr.mxu0 0.0
  %2258 = vmatpush1.msra.mxu0 0.0
  %2259 = vmatprep.subr.mxu0 0.0
  %2260 = vmatpush1.msra.mxu0 %v2222
  %2261 = vmatprep.subr.mxu0 0.0
  %2262 = vmatpush1.msra.mxu0 %v2221
  %2263 = vmatprep.subr.mxu0 0.0
  %2264 = vmatpush1.msra.mxu0 %v2220
  %2265 = vmatprep.subr.mxu0 0.0
  %2266 = vmatpush1.msra.mxu0 %v2219
  %2267 = vmatprep.subr.mxu0 0.0
  %2268 = vmatpush2.msra.mxu0 0.0
  %2269 = vmatprep.subr.mxu0 0.0
  %2270 = vmatpush2.msra.mxu0 0.0
  %2271 = vmatprep.subr.mxu0 0.0
  %2272 = vmatpush2.msra.mxu0 0.0
  %2273 = vmatprep.subr.mxu0 0.0
  %2274 = vmatpush2.msra.mxu0 0.0
  %2275 = vmatprep.subr.mxu0 0.0
  %2276 = vmatpush2.msra.mxu0 0.0
  %2277 = vmatprep.subr.mxu0 0.0
  %2278 = vmatpush2.msra.mxu0 0.0
  %2279 = vmatprep.subr.mxu0 0.0
  %2280 = vmatpush2.msra.mxu0 0.0
  %2281 = vmatprep.subr.mxu0 0.0
  %2282 = vmatpush2.msra.mxu0 0.0
  %2283 = vmatprep.subr.mxu0 0.0
  %2284 = vmatpush2.msra.mxu0 0.0
  %2285 = vmatprep.subr.mxu0 0.0
  %2286 = vmatpush2.msra.mxu0 0.0
  %2287 = vmatprep.subr.mxu0 0.0
  %2288 = vmatpush2.msra.mxu0 0.0
  %2289 = vmatprep.subr.mxu0 0.0
  %2290 = vmatpush2.msra.mxu0 0.0
  %2291 = vmatprep.subr.mxu0 0.0
  %2292 = vmatpush2.msra.mxu0 0.0
  %2293 = vmatprep.subr.mxu0 0.0
  %2294 = vmatpush2.msra.mxu0 0.0
  %2295 = vmatprep.subr.mxu0 0.0
  %2296 = vmatpush2.msra.mxu0 0.0
  %2297 = vmatprep.subr.mxu0 0.0
  %2298 = vmatpush2.msra.mxu0 0.0
  %2299 = vmatprep.mubr.f32.mxu0 0.0
  %2300 = vmatmul.mubr.f32.gmra.mxu0 %v2233
  %v2301 = vpop.f32.mrf.mxu0
  %v2302 = vadd.f32 %v2228, %v2301
  %v2303 = vpop.f32.mrf.mxu0
  %2304 = vdwg.mxu0
  %vm2305 = vcmask 7168
  %2306 = vst.msk [vmem:[%s6] sm:$0xff] %vm2305, %v2302
  // Predicated region
  $region26: #{lstm_forward.1} parent=0 // pred_check
    _
  $region27: #{lstm_forward.1} parent=0 // pred_check_branch
    %2308 = sbr.rel (0) target = $region29
  $region28: #{lstm_forward.1} parent=0 // pred_region
    _
  $region29: #{lstm_forward.1} parent=0 // pred_fallthru
    _
  // Predicated region
  $region30: #{lstm_forward.1} parent=0 // pred_check
    _
  $region31: #{lstm_forward.1} parent=0 // pred_check_branch
    %2310 = sbr.rel (0) target = $region33
  $region32: #{lstm_forward.1} parent=0 // pred_region
    _
  $region33: #{lstm_forward.1} parent=0 // pred_fallthru
    _

</llo_original>
